<compile_context>
chip_gen: v7x
topology: tpu7x:2x2x1
jax: 0.10.0
libtpu: 0.0.40
codegen_flags: <defaults>
</compile_context>

<pallas_src>
import math
import functools

import jax
import jax.numpy as jnp
from jax import lax
from jax.experimental import pallas as pl
from jax.experimental.pallas import tpu as pltpu


def _attn_kernel(x_ref, wq_ref, wk_ref, wv_ref, bq_ref, bk_ref, bv_ref,
                 wp3_ref, bp_ref, o_ref, *, num_heads, batch, seq):
    """Single grid step: Q/K/V projections over all B*T rows, per-batch
    multi-head causal attention, head-major output projection, lane-dense
    (padded, unmasked) stores."""
    B, T, H = batch, seq, num_heads
    BT, C = x_ref.shape
    Dh = C // H

    # bf16 MXU operands, f32 accumulation.  1/sqrt(Dh) is folded into wq/bq.
    xb = x_ref[...].astype(jnp.bfloat16)                               # (B*T, C)
    q = jnp.dot(xb, wq_ref[...], preferred_element_type=jnp.float32) + bq_ref[...]
    k = jnp.dot(xb, wk_ref[...], preferred_element_type=jnp.float32) + bk_ref[...]
    v = jnp.dot(xb, wv_ref[...], preferred_element_type=jnp.float32) + bv_ref[...]

    # Finite additive causal bias (no -inf / NaN edge cases), shared by all
    # batches and heads.
    rows = lax.broadcasted_iota(jnp.int32, (T, T), 0)
    cols = lax.broadcasted_iota(jnp.int32, (T, T), 1)
    causal_bias = jnp.where(cols <= rows, 0.0, -1e30).astype(jnp.float32)  # (T, T)

    wp3 = wp3_ref[...]                                   # (H, Dh, C_pad) bf16
    bp = bp_ref[...]                                     # (1, C_pad) f32

    # TODO(synk): for larger B, move this to a "parallel" grid axis instead of
    # a trace-time Python unroll.
    for b in range(B):
        r0 = b * T                                       # sublane-aligned (T == 8)
        qb, kb, vb = q[r0:r0 + T, :], k[r0:r0 + T, :], v[r0:r0 + T, :]

        # (T, C) -> (H, T, Dh): tiny head-major permutations (see header note).
        qh = jnp.transpose(qb.reshape(T, H, Dh), (1, 0, 2)).astype(jnp.bfloat16)
        kh = jnp.transpose(kb.reshape(T, H, Dh), (1, 0, 2)).astype(jnp.bfloat16)
        vh = jnp.transpose(vb.reshape(T, H, Dh), (1, 0, 2)).astype(jnp.bfloat16)

        # Scores: leading-batch einsum (no operand transposes inserted).
        att = jnp.einsum('htd,hsd->hts', qh, kh,
                         preferred_element_type=jnp.float32)           # (H, T, T)
        att = att + causal_bias[None, :, :]

        # Softmax in f32 with deferred normalization (divide after PV).
        att_max = jnp.max(att, axis=-1, keepdims=True)
        p = jnp.exp(att - att_max)                                     # (H, T, T)
        denom = jnp.sum(p, axis=-1, keepdims=True)                     # (H, T, 1)

        yh = jnp.einsum('hts,hsd->htd', p.astype(jnp.bfloat16), vh,
                        preferred_element_type=jnp.float32)            # (H, T, Dh)
        yh = yh / denom                                                # exact f32

        # attn_drop: identity (eval mode)

        # Output projection with the head merge folded into a head-major
        # weight:  out[t, c] = sum_h sum_d yh[h, t, d] * wp3[h, d, c]
        ob = jnp.einsum('htd,hdc->htc', yh.astype(jnp.bfloat16), wp3,
                        preferred_element_type=jnp.float32)            # (H, T, Cp)
        ob = jnp.sum(ob, axis=0) + bp                                  # (T, C_pad)

        # resid_drop: identity (eval mode)

        # Lane-dense, unmasked store: (T, C_pad) with C_pad a multiple of 128.
        o_ref[pl.ds(r0, T), :] = ob.astype(o_ref.dtype)


def prepare_params(params, num_heads):
    """One-time host-side weight prep, hoisted out of the per-call jitted path.

    PyTorch Linear is y = x @ W.T + b with W of shape (out, in); we store
    W.T (C_in, C_out), fold the 1/sqrt(Dh) attention scale into the query
    projection, keep the output-projection weight head-major (H, Dh, C), pad
    its output columns to a multiple of 128 lanes for unmasked stores, and
    cast matmul operands to bf16 (biases stay f32, added after accumulation).
    """
    C = params["wq"].shape[0]
    assert C % num_heads == 0
    Dh = C // num_heads
    scale = 1.0 / math.sqrt(Dh)
    c_pad = ((C + 127) // 128) * 128

    wp3 = params["wp"].T.reshape(num_heads, Dh, C)          # [h, d, c]
    wp3 = jnp.pad(wp3, ((0, 0), (0, 0), (0, c_pad - C)))
    bp = jnp.pad(params["bp"], ((0, 0), (0, c_pad - C)))

    return {
        "wq": (params["wq"].T * scale).astype(jnp.bfloat16),
        "wk": params["wk"].T.astype(jnp.bfloat16),
        "wv": params["wv"].T.astype(jnp.bfloat16),
        "bq": (params["bq"] * scale).astype(jnp.float32),
        "bk": params["bk"].astype(jnp.float32),
        "bv": params["bv"].astype(jnp.float32),
        "wp3": wp3.astype(jnp.bfloat16),
        "bp": bp.astype(jnp.float32),
    }


@functools.partial(jax.jit, static_argnames=("num_heads",))
def causal_self_attention(x, prepped, num_heads):
    """x: (B, T, C) f32.  prepped: output of prepare_params()."""
    B, T, C = x.shape
    assert C % num_heads == 0
    c_pad = prepped["wp3"].shape[-1]

    x2d = x.reshape(B * T, C)
    vmem = pl.BlockSpec(memory_space=pltpu.MemorySpace.VMEM)

    out_pad = pl.pallas_call(
        functools.partial(_attn_kernel, num_heads=num_heads, batch=B, seq=T),
        out_shape=jax.ShapeDtypeStruct((B * T, c_pad), x.dtype),
        in_specs=[vmem] * 9,
        out_specs=vmem,
    )(x2d, prepped["wq"], prepped["wk"], prepped["wv"],
      prepped["bq"], prepped["bk"], prepped["bv"],
      prepped["wp3"], prepped["bp"])

    return out_pad[:, :C].reshape(B, T, C)


def _reference(x, params, num_heads):
    """Pure-JAX f32 reference mirroring the PyTorch forward (eval mode)."""
    B, T, C = x.shape
    H = num_heads
    Dh = C // H

    def lin(z, w, b):
        return z @ w.T + b

    q = lin(x, params["wq"], params["bq"]).reshape(B, T, H, Dh).transpose(0, 2, 1, 3)
    k = lin(x, params["wk"], params["bk"]).reshape(B, T, H, Dh).transpose(0, 2, 1, 3)
    v = lin(x, params["wv"], params["bv"]).reshape(B, T, H, Dh).transpose(0, 2, 1, 3)
    att = jnp.einsum('bhtd,bhsd->bhts', q, k) / math.sqrt(Dh)
    mask = jnp.tril(jnp.ones((T, T), bool))
    att = jnp.where(mask[None, None], att, -jnp.inf)
    att = jax.nn.softmax(att, axis=-1)
    y = jnp.einsum('bhts,bhsd->bhtd', att, v)
    y = y.transpose(0, 2, 1, 3).reshape(B, T, C)
    return lin(y, params["wp"], params["bp"])


if __name__ == "__main__":
    # Config implied by the module: dim_hidden=32, num_heads=4, length_eq=8
    B, T, C, H = 2, 8, 32, 4

    key = jax.random.PRNGKey(0)
    keys = jax.random.split(key, 9)
    bound = 1.0 / math.sqrt(C)   # nn.Linear default init range

    params = {
        "wq": jax.random.uniform(keys[0], (C, C), jnp.float32, -bound, bound),
        "bq": jax.random.uniform(keys[1], (1, C), jnp.float32, -bound, bound),
        "wk": jax.random.uniform(keys[2], (C, C), jnp.float32, -bound, bound),
        "bk": jax.random.uniform(keys[3], (1, C), jnp.float32, -bound, bound),
        "wv": jax.random.uniform(keys[4], (C, C), jnp.float32, -bound, bound),
        "bv": jax.random.uniform(keys[5], (1, C), jnp.float32, -bound, bound),
        "wp": jax.random.uniform(keys[6], (C, C), jnp.float32, -bound, bound),
        "bp": jax.random.uniform(keys[7], (1, C), jnp.float32, -bound, bound),
    }
    x = jax.random.normal(keys[8], (B, T, C), jnp.float32)

    prepped = prepare_params(params, num_heads=H)          # one-time prep
    out = causal_self_attention(x, prepped, num_heads=H)
    out = jax.block_until_ready(out)

    ref = _reference(x, params, num_heads=H)
    assert out.shape == (B, T, C)
    # Tolerance covers bf16 MXU operands (f32 accumulation, f32 softmax, exact
    # normalization); observed error is a few 1e-3.
    assert jnp.allclose(out, ref, atol=2e-2, rtol=2e-2), "mismatch vs reference"

    # TODO(synk): attn_drop / resid_drop are identity here (eval-mode
    # semantics); training-mode dropout would need pltpu.prng_random_bits.
    print("KERNEL_OK")
</pallas_src>

<mosaic_0001>
module attributes {stable_mosaic.version = 11 : i64} {
  func.func @_attn_kernel(%arg0: memref<16x32xf32, #tpu.memory_space<vmem>>, %arg1: memref<32x32xbf16, #tpu.memory_space<vmem>>, %arg2: memref<32x32xbf16, #tpu.memory_space<vmem>>, %arg3: memref<32x32xbf16, #tpu.memory_space<vmem>>, %arg4: memref<1x32xf32, #tpu.memory_space<vmem>>, %arg5: memref<1x32xf32, #tpu.memory_space<vmem>>, %arg6: memref<1x32xf32, #tpu.memory_space<vmem>>, %arg7: memref<4x8x128xbf16, #tpu.memory_space<vmem>>, %arg8: memref<1x128xf32, #tpu.memory_space<vmem>>, %arg9: memref<16x128xf32, #tpu.memory_space<vmem>>) attributes {dimension_semantics = [], scalar_prefetch = 0 : i64, scratch_operands = 0 : i64, tpu.core_type = #tpu.core_type<tc>} {
    %c0 = arith.constant 0 : index
    %c0_0 = arith.constant 0 : index
    %0 = vector.load %arg0[%c0, %c0_0] : memref<16x32xf32, #tpu.memory_space<vmem>>, vector<16x32xf32>
    %1 = arith.truncf %0 : vector<16x32xf32> to vector<16x32xbf16>
    %c0_1 = arith.constant 0 : index
    %c0_2 = arith.constant 0 : index
    %2 = vector.load %arg1[%c0_1, %c0_2] : memref<32x32xbf16, #tpu.memory_space<vmem>>, vector<32x32xbf16>
    %cst = arith.constant dense<0.000000e+00> : vector<16x32xf32>
    %3 = tpu.matmul %1, %2, %cst {dimension_numbers = #tpu.dot_dimension_numbers<[1], [0], [0], [1], [0, 0, 1, 1], [], []>} : vector<16x32xbf16>, vector<32x32xbf16>, vector<16x32xf32> -> vector<16x32xf32>
    %c0_3 = arith.constant 0 : index
    %c0_4 = arith.constant 0 : index
    %4 = vector.load %arg4[%c0_3, %c0_4] : memref<1x32xf32, #tpu.memory_space<vmem>>, vector<1x32xf32>
    %5 = vector.broadcast %4 : vector<1x32xf32> to vector<16x32xf32>
    %6 = arith.addf %3, %5 : vector<16x32xf32>
    %c0_5 = arith.constant 0 : index
    %c0_6 = arith.constant 0 : index
    %7 = vector.load %arg2[%c0_5, %c0_6] : memref<32x32xbf16, #tpu.memory_space<vmem>>, vector<32x32xbf16>
    %cst_7 = arith.constant dense<0.000000e+00> : vector<16x32xf32>
    %8 = tpu.matmul %1, %7, %cst_7 {dimension_numbers = #tpu.dot_dimension_numbers<[1], [0], [0], [1], [0, 0, 1, 1], [], []>} : vector<16x32xbf16>, vector<32x32xbf16>, vector<16x32xf32> -> vector<16x32xf32>
    %c0_8 = arith.constant 0 : index
    %c0_9 = arith.constant 0 : index
    %9 = vector.load %arg5[%c0_8, %c0_9] : memref<1x32xf32, #tpu.memory_space<vmem>>, vector<1x32xf32>
    %10 = vector.broadcast %9 : vector<1x32xf32> to vector<16x32xf32>
    %11 = arith.addf %8, %10 : vector<16x32xf32>
    %c0_10 = arith.constant 0 : index
    %c0_11 = arith.constant 0 : index
    %12 = vector.load %arg3[%c0_10, %c0_11] : memref<32x32xbf16, #tpu.memory_space<vmem>>, vector<32x32xbf16>
    %cst_12 = arith.constant dense<0.000000e+00> : vector<16x32xf32>
    %13 = tpu.matmul %1, %12, %cst_12 {dimension_numbers = #tpu.dot_dimension_numbers<[1], [0], [0], [1], [0, 0, 1, 1], [], []>} : vector<16x32xbf16>, vector<32x32xbf16>, vector<16x32xf32> -> vector<16x32xf32>
    %c0_13 = arith.constant 0 : index
    %c0_14 = arith.constant 0 : index
    %14 = vector.load %arg6[%c0_13, %c0_14] : memref<1x32xf32, #tpu.memory_space<vmem>>, vector<1x32xf32>
    %15 = vector.broadcast %14 : vector<1x32xf32> to vector<16x32xf32>
    %16 = arith.addf %13, %15 : vector<16x32xf32>
    %17 = tpu.iota {dimensions = array<i32: 0>} : vector<8x8xi32>
    %18 = tpu.iota {dimensions = array<i32: 1>} : vector<8x8xi32>
    %19 = arith.cmpi sle, %18, %17 : vector<8x8xi32>
    %cst_15 = arith.constant 0.000000e+00 : f32
    %cst_16 = arith.constant -1.000000e+30 : f32
    %20 = vector.broadcast %cst_15 : f32 to vector<8x8xf32>
    %21 = vector.broadcast %cst_16 : f32 to vector<8x8xf32>
    %22 = arith.select %19, %20, %21 : vector<8x8xi1>, vector<8x8xf32>
    %c0_17 = arith.constant 0 : index
    %c0_18 = arith.constant 0 : index
    %c0_19 = arith.constant 0 : index
    %23 = vector.load %arg7[%c0_17, %c0_18, %c0_19] : memref<4x8x128xbf16, #tpu.memory_space<vmem>>, vector<4x8x128xbf16>
    %c0_20 = arith.constant 0 : index
    %c0_21 = arith.constant 0 : index
    %24 = vector.load %arg8[%c0_20, %c0_21] : memref<1x128xf32, #tpu.memory_space<vmem>>, vector<1x128xf32>
    %25 = vector.extract_strided_slice %6 {offsets = [0, 0], sizes = [8, 32], strides = [1, 1]} : vector<16x32xf32> to vector<8x32xf32>
    %26 = vector.extract_strided_slice %11 {offsets = [0, 0], sizes = [8, 32], strides = [1, 1]} : vector<16x32xf32> to vector<8x32xf32>
    %27 = vector.extract_strided_slice %16 {offsets = [0, 0], sizes = [8, 32], strides = [1, 1]} : vector<16x32xf32> to vector<8x32xf32>
    %28 = vector.shape_cast %25 : vector<8x32xf32> to vector<8x4x8xf32>
    %29 = tpu.transpose %28, [1, 0, 2] : vector<8x4x8xf32> -> vector<4x8x8xf32>
    %30 = arith.truncf %29 : vector<4x8x8xf32> to vector<4x8x8xbf16>
    %31 = vector.shape_cast %26 : vector<8x32xf32> to vector<8x4x8xf32>
    %32 = tpu.transpose %31, [1, 0, 2] : vector<8x4x8xf32> -> vector<4x8x8xf32>
    %33 = arith.truncf %32 : vector<4x8x8xf32> to vector<4x8x8xbf16>
    %34 = vector.shape_cast %27 : vector<8x32xf32> to vector<8x4x8xf32>
    %35 = tpu.transpose %34, [1, 0, 2] : vector<8x4x8xf32> -> vector<4x8x8xf32>
    %36 = arith.truncf %35 : vector<4x8x8xf32> to vector<4x8x8xbf16>
    "tpu.trace_start"() <{level = 10 : i32, message = "htd,hsd->hts"}> : () -> ()
    %cst_22 = arith.constant dense<0.000000e+00> : vector<4x8x8xf32>
    %37 = tpu.matmul %30, %33, %cst_22 {dimension_numbers = #tpu.dot_dimension_numbers<[2], [2], [1], [1], [0, 0, 0, 1, 1, 1], [0], [0]>} : vector<4x8x8xbf16>, vector<4x8x8xbf16>, vector<4x8x8xf32> -> vector<4x8x8xf32>
    "tpu.trace_stop"() : () -> ()
    %38 = vector.shape_cast %22 : vector<8x8xf32> to vector<1x8x8xf32>
    %39 = vector.broadcast %38 : vector<1x8x8xf32> to vector<4x8x8xf32>
    %40 = arith.addf %37, %39 : vector<4x8x8xf32>
    %cst_23 = arith.constant dense<0xFF800000> : vector<4x8xf32>
    %41 = vector.multi_reduction <maximumf>, %40, %cst_23 [2] : vector<4x8x8xf32> to vector<4x8xf32>
    %42 = vector.shape_cast %41 : vector<4x8xf32> to vector<4x8x1xf32>
    %43 = vector.broadcast %42 : vector<4x8x1xf32> to vector<4x8x8xf32>
    %44 = arith.subf %40, %43 : vector<4x8x8xf32>
    %45 = math.exp %44 : vector<4x8x8xf32>
    %cst_24 = arith.constant dense<0.000000e+00> : vector<4x8xf32>
    %46 = vector.multi_reduction <add>, %45, %cst_24 [2] : vector<4x8x8xf32> to vector<4x8xf32>
    %47 = vector.shape_cast %46 : vector<4x8xf32> to vector<4x8x1xf32>
    %48 = arith.truncf %45 : vector<4x8x8xf32> to vector<4x8x8xbf16>
    "tpu.trace_start"() <{level = 10 : i32, message = "hts,hsd->htd"}> : () -> ()
    %cst_25 = arith.constant dense<0.000000e+00> : vector<4x8x8xf32>
    %49 = tpu.matmul %48, %36, %cst_25 {dimension_numbers = #tpu.dot_dimension_numbers<[2], [1], [1], [2], [0, 0, 0, 1, 1, 2], [0], [0]>} : vector<4x8x8xbf16>, vector<4x8x8xbf16>, vector<4x8x8xf32> -> vector<4x8x8xf32>
    "tpu.trace_stop"() : () -> ()
    %50 = vector.broadcast %47 : vector<4x8x1xf32> to vector<4x8x8xf32>
    %51 = arith.divf %49, %50 : vector<4x8x8xf32>
    %52 = arith.truncf %51 : vector<4x8x8xf32> to vector<4x8x8xbf16>
    "tpu.trace_start"() <{level = 10 : i32, message = "htd,hdc->htc"}> : () -> ()
    %cst_26 = arith.constant dense<0.000000e+00> : vector<4x8x128xf32>
    %53 = tpu.matmul %52, %23, %cst_26 {dimension_numbers = #tpu.dot_dimension_numbers<[2], [1], [1], [2], [0, 0, 0, 1, 1, 2], [0], [0]>} : vector<4x8x8xbf16>, vector<4x8x128xbf16>, vector<4x8x128xf32> -> vector<4x8x128xf32>
    "tpu.trace_stop"() : () -> ()
    %cst_27 = arith.constant dense<0.000000e+00> : vector<8x128xf32>
    %54 = vector.multi_reduction <add>, %53, %cst_27 [0] : vector<4x8x128xf32> to vector<8x128xf32>
    %55 = vector.broadcast %24 : vector<1x128xf32> to vector<8x128xf32>
    %56 = arith.addf %54, %55 : vector<8x128xf32>
    %c0_28 = arith.constant 0 : index
    %c0_29 = arith.constant 0 : index
    %57 = vector.load %arg9[%c0_28, %c0_29] : memref<16x128xf32, #tpu.memory_space<vmem>>, vector<8x128xf32>
    tpu.vector_store %arg9[%c0_28, %c0_29], %56 {strides = array<i32>} : memref<16x128xf32, #tpu.memory_space<vmem>>, vector<8x128xf32>,
    %58 = vector.extract_strided_slice %6 {offsets = [8, 0], sizes = [8, 32], strides = [1, 1]} : vector<16x32xf32> to vector<8x32xf32>
    %59 = vector.extract_strided_slice %11 {offsets = [8, 0], sizes = [8, 32], strides = [1, 1]} : vector<16x32xf32> to vector<8x32xf32>
    %60 = vector.extract_strided_slice %16 {offsets = [8, 0], sizes = [8, 32], strides = [1, 1]} : vector<16x32xf32> to vector<8x32xf32>
    %61 = vector.shape_cast %58 : vector<8x32xf32> to vector<8x4x8xf32>
    %62 = tpu.transpose %61, [1, 0, 2] : vector<8x4x8xf32> -> vector<4x8x8xf32>
    %63 = arith.truncf %62 : vector<4x8x8xf32> to vector<4x8x8xbf16>
    %64 = vector.shape_cast %59 : vector<8x32xf32> to vector<8x4x8xf32>
    %65 = tpu.transpose %64, [1, 0, 2] : vector<8x4x8xf32> -> vector<4x8x8xf32>
    %66 = arith.truncf %65 : vector<4x8x8xf32> to vector<4x8x8xbf16>
    %67 = vector.shape_cast %60 : vector<8x32xf32> to vector<8x4x8xf32>
    %68 = tpu.transpose %67, [1, 0, 2] : vector<8x4x8xf32> -> vector<4x8x8xf32>
    %69 = arith.truncf %68 : vector<4x8x8xf32> to vector<4x8x8xbf16>
    "tpu.trace_start"() <{level = 10 : i32, message = "htd,hsd->hts"}> : () -> ()
    %cst_30 = arith.constant dense<0.000000e+00> : vector<4x8x8xf32>
    %70 = tpu.matmul %63, %66, %cst_30 {dimension_numbers = #tpu.dot_dimension_numbers<[2], [2], [1], [1], [0, 0, 0, 1, 1, 1], [0], [0]>} : vector<4x8x8xbf16>, vector<4x8x8xbf16>, vector<4x8x8xf32> -> vector<4x8x8xf32>
    "tpu.trace_stop"() : () -> ()
    %71 = vector.shape_cast %22 : vector<8x8xf32> to vector<1x8x8xf32>
    %72 = vector.broadcast %71 : vector<1x8x8xf32> to vector<4x8x8xf32>
    %73 = arith.addf %70, %72 : vector<4x8x8xf32>
    %cst_31 = arith.constant dense<0xFF800000> : vector<4x8xf32>
    %74 = vector.multi_reduction <maximumf>, %73, %cst_31 [2] : vector<4x8x8xf32> to vector<4x8xf32>
    %75 = vector.shape_cast %74 : vector<4x8xf32> to vector<4x8x1xf32>
    %76 = vector.broadcast %75 : vector<4x8x1xf32> to vector<4x8x8xf32>
    %77 = arith.subf %73, %76 : vector<4x8x8xf32>
    %78 = math.exp %77 : vector<4x8x8xf32>
    %cst_32 = arith.constant dense<0.000000e+00> : vector<4x8xf32>
    %79 = vector.multi_reduction <add>, %78, %cst_32 [2] : vector<4x8x8xf32> to vector<4x8xf32>
    %80 = vector.shape_cast %79 : vector<4x8xf32> to vector<4x8x1xf32>
    %81 = arith.truncf %78 : vector<4x8x8xf32> to vector<4x8x8xbf16>
    "tpu.trace_start"() <{level = 10 : i32, message = "hts,hsd->htd"}> : () -> ()
    %cst_33 = arith.constant dense<0.000000e+00> : vector<4x8x8xf32>
    %82 = tpu.matmul %81, %69, %cst_33 {dimension_numbers = #tpu.dot_dimension_numbers<[2], [1], [1], [2], [0, 0, 0, 1, 1, 2], [0], [0]>} : vector<4x8x8xbf16>, vector<4x8x8xbf16>, vector<4x8x8xf32> -> vector<4x8x8xf32>
    "tpu.trace_stop"() : () -> ()
    %83 = vector.broadcast %80 : vector<4x8x1xf32> to vector<4x8x8xf32>
    %84 = arith.divf %82, %83 : vector<4x8x8xf32>
    %85 = arith.truncf %84 : vector<4x8x8xf32> to vector<4x8x8xbf16>
    "tpu.trace_start"() <{level = 10 : i32, message = "htd,hdc->htc"}> : () -> ()
    %cst_34 = arith.constant dense<0.000000e+00> : vector<4x8x128xf32>
    %86 = tpu.matmul %85, %23, %cst_34 {dimension_numbers = #tpu.dot_dimension_numbers<[2], [1], [1], [2], [0, 0, 0, 1, 1, 2], [0], [0]>} : vector<4x8x8xbf16>, vector<4x8x128xbf16>, vector<4x8x128xf32> -> vector<4x8x128xf32>
    "tpu.trace_stop"() : () -> ()
    %cst_35 = arith.constant dense<0.000000e+00> : vector<8x128xf32>
    %87 = vector.multi_reduction <add>, %86, %cst_35 [0] : vector<4x8x128xf32> to vector<8x128xf32>
    %88 = vector.broadcast %24 : vector<1x128xf32> to vector<8x128xf32>
    %89 = arith.addf %87, %88 : vector<8x128xf32>
    %c8 = arith.constant 8 : index
    %c0_36 = arith.constant 0 : index
    %90 = vector.load %arg9[%c8, %c0_36] : memref<16x128xf32, #tpu.memory_space<vmem>>, vector<8x128xf32>
    tpu.vector_store %arg9[%c8, %c0_36], %89 {strides = array<i32>} : memref<16x128xf32, #tpu.memory_space<vmem>>, vector<8x128xf32>,
    return
  }
}

</mosaic_0001>

<llo_original>
// kernel: causal_self_attention.1
$region0: #{causal_self_attention.1}
  #allocation0 [shape = 'u32[]', space=smem, size = 0x4, offset = 0x4, fixed_abs, tag = 'smem constant byte address 0x4 - core index']
  #allocation1 [shape = 'u32[144,128]{1,0:T(1,128)}', space=vmem, size = 0x12000, scoped, tag = 'internal scratch']
  %s0 = inlined_call_operand.hbm [shape: f32[16,32], index: 0, kind: input, shape index: {}]
  %s1 = inlined_call_operand.vmem [shape: bf16[32,32], index: 1, kind: input, shape index: {}]
  %s2 = inlined_call_operand.hbm [shape: bf16[32,32], index: 2, kind: input, shape index: {}]
  %s3 = inlined_call_operand.vmem [shape: bf16[32,32], index: 3, kind: input, shape index: {}]
  %s4 = inlined_call_operand.vmem [shape: f32[1,32], index: 4, kind: input, shape index: {}]
  %s5 = inlined_call_operand.vmem [shape: f32[1,32], index: 5, kind: input, shape index: {}]
  %s6 = inlined_call_operand.hbm [shape: f32[1,32], index: 6, kind: input, shape index: {}]
  %s7 = inlined_call_operand.hbm [shape: bf16[4,8,128], index: 7, kind: input, shape index: {}]
  %s8 = inlined_call_operand.hbm [shape: f32[1,128], index: 8, kind: input, shape index: {}]
  %s9 = inlined_call_operand.vmem [shape: f32[16,128], index: 9, kind: output, shape index: {}]
  %s10 = sld [smem:[#allocation0]]
  $region66: #{causal_self_attention.1} parent=0
    _
  %s12 = ssub.s32 1, %s10
  %s13 = scalar_select 0, %s12, %s10
  $region1: #{causal_self_attention.1} parent=0
    #allocation2 [shape = 'u8[8192]{0}', space=vmem, size = 0x2000, scoped, tag = 'input window, operand 0, single buffered']
    #allocation3 [shape = 's32[1]{0}', space=sflag, size = 0x4, scoped, tag = 'scoped memory for causal_self_attention.1']
    #allocation4 [shape = 'u8[8192]{0}', space=vmem, size = 0x2000, scoped, tag = 'input window, operand 2, single buffered']
    #allocation5 [shape = 's32[1]{0}', space=sflag, size = 0x4, scoped, tag = 'scoped memory for causal_self_attention.1']
    #allocation6 [shape = 'u8[512]{0}', space=vmem, size = 0x400, scoped, tag = 'input window, operand 6, single buffered']
    #allocation7 [shape = 'u8[8192]{0}', space=vmem, size = 0x2000, scoped, tag = 'input window, operand 7, single buffered']
    #allocation8 [shape = 's32[1]{0}', space=sflag, size = 0x4, scoped, tag = 'scoped memory for causal_self_attention.1']
    #allocation9 [shape = 'u8[512]{0}', space=vmem, size = 0x400, scoped, tag = 'input window, operand 8, single buffered']
    %14 = vsyncpa [#allocation3], 0
    %15 = vsyncpa [#allocation5], 0
    %16 = vsyncpa [#allocation8], 0
    // Predicated region
    $region2: #{causal_self_attention.1} parent=1 // pred_check
      _
    $region3: #{causal_self_attention.1} parent=1 // pred_check_branch
      %18 = sbr.rel (0) target = $region5
    $region4: #{causal_self_attention.1} parent=1 // pred_region
      %s20 = ssub.s32 256, 256
      %21 = vsyncadd [#allocation3], %s20
      %s22 = sshll.u32 [#allocation2], 4
      %s23 = int_to_ptr.vmem [resolvable:$true] %s22
      %28 = dma.hbm_to_vmem [thread:$0]  %s0, 256, %s23, [#allocation3], 128, 128, 8
    $region5: #{causal_self_attention.1} parent=1 // pred_fallthru
      _
    // Predicated region
    $region6: #{causal_self_attention.1} parent=1 // pred_check
      _
    $region7: #{causal_self_attention.1} parent=1 // pred_check_branch
      %30 = sbr.rel (0) target = $region9
    $region8: #{causal_self_attention.1} parent=1 // pred_region
      _
    $region9: #{causal_self_attention.1} parent=1 // pred_fallthru
      _
    // Predicated region
    $region10: #{causal_self_attention.1} parent=1 // pred_check
      _
    $region11: #{causal_self_attention.1} parent=1 // pred_check_branch
      %32 = sbr.rel (0) target = $region13
    $region12: #{causal_self_attention.1} parent=1 // pred_region
      %s34 = ssub.s32 256, 256
      %35 = vsyncadd [#allocation5], %s34
      %s36 = sshll.u32 [#allocation4], 4
      %s37 = int_to_ptr.vmem [resolvable:$true] %s36
      %42 = dma.hbm_to_vmem [thread:$0]  %s2, 256, %s37, [#allocation5], 64, 64, 4
    $region13: #{causal_self_attention.1} parent=1 // pred_fallthru
      _
    // Predicated region
    $region14: #{causal_self_attention.1} parent=1 // pred_check
      _
    $region15: #{causal_self_attention.1} parent=1 // pred_check_branch
      %44 = sbr.rel (0) target = $region17
    $region16: #{causal_self_attention.1} parent=1 // pred_region
      _
    $region17: #{causal_self_attention.1} parent=1 // pred_fallthru
      _
    // Predicated region
    $region18: #{causal_self_attention.1} parent=1 // pred_check
      _
    $region19: #{causal_self_attention.1} parent=1 // pred_check_branch
      %46 = sbr.rel (0) target = $region21
    $region20: #{causal_self_attention.1} parent=1 // pred_region
      _
    $region21: #{causal_self_attention.1} parent=1 // pred_fallthru
      _
    // Predicated region
    $region22: #{causal_self_attention.1} parent=1 // pred_check
      _
    $region23: #{causal_self_attention.1} parent=1 // pred_check_branch
      %48 = sbr.rel (0) target = $region25
    $region24: #{causal_self_attention.1} parent=1 // pred_region
      _
    $region25: #{causal_self_attention.1} parent=1 // pred_fallthru
      _
    // Predicated region
    $region26: #{causal_self_attention.1} parent=1 // pred_check
      _
    $region27: #{causal_self_attention.1} parent=1 // pred_check_branch
      %50 = sbr.rel (0) target = $region29
    $region28: #{causal_self_attention.1} parent=1 // pred_region
      %s52 = ssub.s32 16, 16
      %53 = vsyncadd [#allocation5], %s52
      %s55 = sshll.u32 [#allocation6], 4
      %s56 = int_to_ptr.vmem [resolvable:$true] %s55
      %58 = dma.hbm_to_vmem [thread:$0]  %s6, 16, %s56, [#allocation5]
    $region29: #{causal_self_attention.1} parent=1 // pred_fallthru
      _
    // Predicated region
    $region30: #{causal_self_attention.1} parent=1 // pred_check
      _
    $region31: #{causal_self_attention.1} parent=1 // pred_check_branch
      %60 = sbr.rel (0) target = $region33
    $region32: #{causal_self_attention.1} parent=1 // pred_region
      %s62 = ssub.s32 256, 256
      %63 = vsyncadd [#allocation8], %s62
      %s64 = sshll.u32 [#allocation7], 4
      %s65 = int_to_ptr.vmem [resolvable:$true] %s64
      %70 = dma.hbm_to_vmem [thread:$0]  %s7, 256, %s65, [#allocation8], 64, 64, 4
    $region33: #{causal_self_attention.1} parent=1 // pred_fallthru
      _
    // Predicated region
    $region34: #{causal_self_attention.1} parent=1 // pred_check
      _
    $region35: #{causal_self_attention.1} parent=1 // pred_check_branch
      %72 = sbr.rel (0) target = $region37
    $region36: #{causal_self_attention.1} parent=1 // pred_region
      %s74 = ssub.s32 16, 16
      %75 = vsyncadd [#allocation8], %s74
      %s77 = sshll.u32 [#allocation9], 4
      %s78 = int_to_ptr.vmem [resolvable:$true] %s77
      %80 = dma.hbm_to_vmem [thread:$0]  %s8, 16, %s78, [#allocation8]
    $region37: #{causal_self_attention.1} parent=1 // pred_fallthru
      _
    // Predicated region
    $region38: #{causal_self_attention.1} parent=1 // pred_check
      _
    $region39: #{causal_self_attention.1} parent=1 // pred_check_branch
      %82 = sbr.rel (0) target = $region41
    $region40: #{causal_self_attention.1} parent=1 // pred_region
      %83 = dma.done [#allocation3], 256
    $region41: #{causal_self_attention.1} parent=1 // pred_fallthru
      _
    // Predicated region
    $region42: #{causal_self_attention.1} parent=1 // pred_check
      _
    $region43: #{causal_self_attention.1} parent=1 // pred_check_branch
      %85 = sbr.rel (0) target = $region45
    $region44: #{causal_self_attention.1} parent=1 // pred_region
      %86 = dma.done [#allocation5], 256
    $region45: #{causal_self_attention.1} parent=1 // pred_fallthru
      _
    // Predicated region
    $region46: #{causal_self_attention.1} parent=1 // pred_check
      _
    $region47: #{causal_self_attention.1} parent=1 // pred_check_branch
      %88 = sbr.rel (0) target = $region49
    $region48: #{causal_self_attention.1} parent=1 // pred_region
      %89 = dma.done [#allocation5], 16
    $region49: #{causal_self_attention.1} parent=1 // pred_fallthru
      _
    // Predicated region
    $region50: #{causal_self_attention.1} parent=1 // pred_check
      _
    $region51: #{causal_self_attention.1} parent=1 // pred_check_branch
      %91 = sbr.rel (0) target = $region53
    $region52: #{causal_self_attention.1} parent=1 // pred_region
      %92 = dma.done [#allocation8], 256
    $region53: #{causal_self_attention.1} parent=1 // pred_fallthru
      _
    // Predicated region
    $region54: #{causal_self_attention.1} parent=1 // pred_check
      _
    $region55: #{causal_self_attention.1} parent=1 // pred_check_branch
      %94 = sbr.rel (0) target = $region57
    $region56: #{causal_self_attention.1} parent=1 // pred_region
      %95 = dma.done [#allocation8], 16
    $region57: #{causal_self_attention.1} parent=1 // pred_fallthru
      _
    %v97 = vld [vmem:[#allocation2] sm:$0xff]
    %v98 = vld [vmem:[#allocation2 + $0x8] sm:$0xff]
    %v99 = vpack.c.bf16 %v98, %v97
    %v100 = vld [vmem:[%s1] sm:$0xf]
    %v101 = vld [vmem:[%s1 + $0x4] sm:$0xf]
    %v102 = vld [vmem:[%s1 + $0x8] sm:$0xf]
    %v103 = vld [vmem:[%s1 + $0xc] sm:$0xf]
    %v104 = vld [vmem:[%s4] sm:$0x1]
    %v106 = vlaneseq
    %v107 = vshrl.u32 %v106, 7
    %v108 = vsub.s32 0, %v107
    %v109 = vrot.slane %v104, %v108
    %v115 = vunpack.c.l.b16 %v100
    %v116 = vunpack.c.l.b16 %v101
    %v117 = vunpack.c.l.b16 %v102
    %v118 = vunpack.c.l.b16 %v103
    %v119 = vpack.c.b16 %v116, %v115
    %v120 = vpack.c.b16 %v118, %v117
    %vm123 = vcmask 261120
    %v125 = vsel %vm123, %v99, 0
    %127 = vmatprep.subr.bf16.mxu0 0
    %128 = vmatpush1.bf16.msra.mxu0 %v119
    %129 = vmatprep.subr.bf16.mxu0 0
    %130 = vmatpush1.bf16.msra.mxu0 %v120
    %131 = vmatprep.subr.bf16.mxu0 0
    %132 = vmatpush1.bf16.msra.mxu0 0
    %133 = vmatprep.subr.bf16.mxu0 0
    %134 = vmatpush1.bf16.msra.mxu0 0
    %135 = vmatprep.subr.bf16.mxu0 0
    %136 = vmatpush1.bf16.msra.mxu0 0
    %137 = vmatprep.subr.bf16.mxu0 0
    %138 = vmatpush1.bf16.msra.mxu0 0
    %139 = vmatprep.subr.bf16.mxu0 0
    %140 = vmatpush1.bf16.msra.mxu0 0
    %141 = vmatprep.subr.bf16.mxu0 0
    %142 = vmatpush1.bf16.msra.mxu0 0
    %143 = vmatprep.subr.bf16.mxu0 0
    %144 = vmatpush1.bf16.msra.mxu0 0
    %145 = vmatprep.subr.bf16.mxu0 0
    %146 = vmatpush1.bf16.msra.mxu0 0
    %147 = vmatprep.subr.bf16.mxu0 0
    %148 = vmatpush1.bf16.msra.mxu0 0
    %149 = vmatprep.subr.bf16.mxu0 0
    %150 = vmatpush1.bf16.msra.mxu0 0
    %151 = vmatprep.subr.bf16.mxu0 0
    %152 = vmatpush1.bf16.msra.mxu0 0
    %153 = vmatprep.subr.bf16.mxu0 0
    %154 = vmatpush1.bf16.msra.mxu0 0
    %155 = vmatprep.subr.bf16.mxu0 0
    %156 = vmatpush1.bf16.msra.mxu0 0
    %157 = vmatprep.subr.bf16.mxu0 0
    %158 = vmatpush1.bf16.msra.mxu0 0
    %159 = vmatprep.mubr.bf16.mxu0 0
    %160 = vmatmul.mubr.bf16.gmra.mrb[0].mxu0 %v125
    %v161 = vpop.f32.mrb[0].mxu0
    %v162 = vadd.f32 %v109, %v161
    %v163 = vpop.f32.mrb[0].mxu0
    %v164 = vpop.f32.mrb[0].mxu0
    %v165 = vadd.f32 %v109, %v164
    %v166 = vpop.f32.mrb[0].mxu0
    %167 = vdwg.mxu0
    %v168 = vld [vmem:[#allocation4] sm:$0xf]
    %v169 = vld [vmem:[#allocation4 + $0x4] sm:$0xf]
    %v170 = vld [vmem:[#allocation4 + $0x8] sm:$0xf]
    %v171 = vld [vmem:[#allocation4 + $0xc] sm:$0xf]
    %v172 = vld [vmem:[%s5] sm:$0x1]
    %v174 = vlaneseq
    %v175 = vshrl.u32 %v174, 7
    %v176 = vsub.s32 0, %v175
    %v177 = vrot.slane %v172, %v176
    %v183 = vunpack.c.l.b16 %v168
    %v184 = vunpack.c.l.b16 %v169
    %v185 = vunpack.c.l.b16 %v170
    %v186 = vunpack.c.l.b16 %v171
    %v187 = vpack.c.b16 %v184, %v183
    %v188 = vpack.c.b16 %v186, %v185
    %191 = vmatprep.subr.bf16.mxu0 0
    %192 = vmatpush1.bf16.msra.mxu0 %v187
    %193 = vmatprep.subr.bf16.mxu0 0
    %194 = vmatpush1.bf16.msra.mxu0 %v188
    %195 = vmatprep.subr.bf16.mxu0 0
    %196 = vmatpush1.bf16.msra.mxu0 0
    %197 = vmatprep.subr.bf16.mxu0 0
    %198 = vmatpush1.bf16.msra.mxu0 0
    %199 = vmatprep.subr.bf16.mxu0 0
    %200 = vmatpush1.bf16.msra.mxu0 0
    %201 = vmatprep.subr.bf16.mxu0 0
    %202 = vmatpush1.bf16.msra.mxu0 0
    %203 = vmatprep.subr.bf16.mxu0 0
    %204 = vmatpush1.bf16.msra.mxu0 0
    %205 = vmatprep.subr.bf16.mxu0 0
    %206 = vmatpush1.bf16.msra.mxu0 0
    %207 = vmatprep.subr.bf16.mxu0 0
    %208 = vmatpush1.bf16.msra.mxu0 0
    %209 = vmatprep.subr.bf16.mxu0 0
    %210 = vmatpush1.bf16.msra.mxu0 0
    %211 = vmatprep.subr.bf16.mxu0 0
    %212 = vmatpush1.bf16.msra.mxu0 0
    %213 = vmatprep.subr.bf16.mxu0 0
    %214 = vmatpush1.bf16.msra.mxu0 0
    %215 = vmatprep.subr.bf16.mxu0 0
    %216 = vmatpush1.bf16.msra.mxu0 0
    %217 = vmatprep.subr.bf16.mxu0 0
    %218 = vmatpush1.bf16.msra.mxu0 0
    %219 = vmatprep.subr.bf16.mxu0 0
    %220 = vmatpush1.bf16.msra.mxu0 0
    %221 = vmatprep.subr.bf16.mxu0 0
    %222 = vmatpush1.bf16.msra.mxu0 0
    %223 = vmatprep.mubr.bf16.mxu0 0
    %224 = vmatmul.mubr.bf16.gmra.mrb[0].mxu0 %v125
    %v225 = vpop.f32.mrb[0].mxu0
    %v226 = vadd.f32 %v177, %v225
    %v227 = vpop.f32.mrb[0].mxu0
    %v228 = vpop.f32.mrb[0].mxu0
    %v229 = vadd.f32 %v177, %v228
    %v230 = vpop.f32.mrb[0].mxu0
    %231 = vdwg.mxu0
    %v232 = vld [vmem:[%s3] sm:$0xf]
    %v233 = vld [vmem:[%s3 + $0x4] sm:$0xf]
    %v234 = vld [vmem:[%s3 + $0x8] sm:$0xf]
    %v235 = vld [vmem:[%s3 + $0xc] sm:$0xf]
    %v236 = vld [vmem:[#allocation6] sm:$0x1]
    %v238 = vlaneseq
    %v239 = vshrl.u32 %v238, 7
    %v240 = vsub.s32 0, %v239
    %v241 = vrot.slane %v236, %v240
    %v247 = vunpack.c.l.b16 %v232
    %v248 = vunpack.c.l.b16 %v233
    %v249 = vunpack.c.l.b16 %v234
    %v250 = vunpack.c.l.b16 %v235
    %v251 = vpack.c.b16 %v248, %v247
    %v252 = vpack.c.b16 %v250, %v249
    %255 = vmatprep.subr.bf16.mxu0 0
    %256 = vmatpush1.bf16.msra.mxu0 %v251
    %257 = vmatprep.subr.bf16.mxu0 0
    %258 = vmatpush1.bf16.msra.mxu0 %v252
    %259 = vmatprep.subr.bf16.mxu0 0
    %260 = vmatpush1.bf16.msra.mxu0 0
    %261 = vmatprep.subr.bf16.mxu0 0
    %262 = vmatpush1.bf16.msra.mxu0 0
    %263 = vmatprep.subr.bf16.mxu0 0
    %264 = vmatpush1.bf16.msra.mxu0 0
    %265 = vmatprep.subr.bf16.mxu0 0
    %266 = vmatpush1.bf16.msra.mxu0 0
    %267 = vmatprep.subr.bf16.mxu0 0
    %268 = vmatpush1.bf16.msra.mxu0 0
    %269 = vmatprep.subr.bf16.mxu0 0
    %270 = vmatpush1.bf16.msra.mxu0 0
    %271 = vmatprep.subr.bf16.mxu0 0
    %272 = vmatpush1.bf16.msra.mxu0 0
    %273 = vmatprep.subr.bf16.mxu0 0
    %274 = vmatpush1.bf16.msra.mxu0 0
    %275 = vmatprep.subr.bf16.mxu0 0
    %276 = vmatpush1.bf16.msra.mxu0 0
    %277 = vmatprep.subr.bf16.mxu0 0
    %278 = vmatpush1.bf16.msra.mxu0 0
    %279 = vmatprep.subr.bf16.mxu0 0
    %280 = vmatpush1.bf16.msra.mxu0 0
    %281 = vmatprep.subr.bf16.mxu0 0
    %282 = vmatpush1.bf16.msra.mxu0 0
    %283 = vmatprep.subr.bf16.mxu0 0
    %284 = vmatpush1.bf16.msra.mxu0 0
    %285 = vmatprep.subr.bf16.mxu0 0
    %286 = vmatpush1.bf16.msra.mxu0 0
    %287 = vmatprep.mubr.bf16.mxu0 0
    %288 = vmatmul.mubr.bf16.gmra.mrb[0].mxu0 %v125
    %v289 = vpop.f32.mrb[0].mxu0
    %v290 = vadd.f32 %v241, %v289
    %v291 = vpop.f32.mrb[0].mxu0
    %v292 = vpop.f32.mrb[0].mxu0
    %v293 = vadd.f32 %v241, %v292
    %v294 = vpop.f32.mrb[0].mxu0
    %295 = vdwg.mxu0
    %v296 = vlaneseq
    %v297 = vshrl.u32 %v296, 7
    %v298 = vlaneseq
    %v299 = vand.u32 %v298, 127
    %vm300 = vcmp.le.s32.totalorder %v299, %v297
    %v301 = vsel %vm300, 0.0, -1e+30
    %v302 = vld [vmem:[#allocation7] sm:$0xf]
    %v303 = vld [vmem:[#allocation7 + $0x4] sm:$0xf]
    %v304 = vld [vmem:[#allocation7 + $0x8] sm:$0xf]
    %v305 = vld [vmem:[#allocation7 + $0xc] sm:$0xf]
    %v306 = vld [vmem:[#allocation9] sm:$0x1]
    %308 = vrot.lane.b32.xlu0 %v162, 120
    %v309 = vpop.permute.xlu0 %308
    %311 = vrot.lane.b32.xlu0 %v162, 112
    %v312 = vpop.permute.xlu0 %311
    %314 = vrot.lane.b32.xlu0 %v162, 104
    %v315 = vpop.permute.xlu0 %314
    %v317 = vcombine.low %v162, %v312
    %v318 = vcombine.high %v162, %v312
    %v320 = vunpack.c.l.s4 1983009808
    %v321 = vunpack.c.0.s8 %v320
    %v322 = vlaneseq
    %v323 = vshrl.u32 %v322, 7
    %v324 = vsub.s32 %v321, %v323
    %v325 = vrot.slane %v317, %v324
    %v327 = vunpack.c.l.s4 1983009808
    %v328 = vunpack.c.0.s8 %v327
    %v329 = vlaneseq
    %v330 = vshrl.u32 %v329, 7
    %v331 = vsub.s32 %v328, %v330
    %v332 = vrot.slane %v318, %v331
    %v333 = vcombine.low %v309, %v315
    %v334 = vcombine.high %v309, %v315
    %v336 = vunpack.c.l.s4 1983009808
    %v337 = vunpack.c.0.s8 %v336
    %v338 = vlaneseq
    %v339 = vshrl.u32 %v338, 7
    %v340 = vsub.s32 %v337, %v339
    %v341 = vrot.slane %v333, %v340
    %v343 = vunpack.c.l.s4 1983009808
    %v344 = vunpack.c.0.s8 %v343
    %v345 = vlaneseq
    %v346 = vshrl.u32 %v345, 7
    %v347 = vsub.s32 %v344, %v346
    %v348 = vrot.slane %v334, %v347
    %v349 = vcombine.low %v325, %v341
    %v350 = vcombine.high %v325, %v341
    %v352 = vunpack.c.l.s4 1934713408
    %v353 = vunpack.c.0.s8 %v352
    %v354 = vlaneseq
    %v355 = vshrl.u32 %v354, 7
    %v356 = vsub.s32 %v353, %v355
    %v357 = vrot.slane %v349, %v356
    %v359 = vunpack.c.l.s4 1934713408
    %v360 = vunpack.c.0.s8 %v359
    %v361 = vlaneseq
    %v362 = vshrl.u32 %v361, 7
    %v363 = vsub.s32 %v360, %v362
    %v364 = vrot.slane %v350, %v363
    %v365 = vcombine.low %v332, %v348
    %v366 = vcombine.high %v332, %v348
    %v368 = vunpack.c.l.s4 1934713408
    %v369 = vunpack.c.0.s8 %v368
    %v370 = vlaneseq
    %v371 = vshrl.u32 %v370, 7
    %v372 = vsub.s32 %v369, %v371
    %v373 = vrot.slane %v365, %v372
    %v375 = vunpack.c.l.s4 1934713408
    %v376 = vunpack.c.0.s8 %v375
    %v377 = vlaneseq
    %v378 = vshrl.u32 %v377, 7
    %v379 = vsub.s32 %v376, %v378
    %v380 = vrot.slane %v366, %v379
    %v381 = vcombine.high %v357, 0.0
    %v382 = vcombine.high %v364, 0.0
    %v383 = vcombine.high %v373, 0.0
    %v384 = vcombine.high %v380, 0.0
    %v385 = vcombine.low %v357, %v364
    %v387 = vunpack.c.l.s4 1983009808
    %v388 = vunpack.c.0.s8 %v387
    %v389 = vlaneseq
    %v390 = vshrl.u32 %v389, 7
    %v391 = vsub.s32 %v388, %v390
    %v392 = vrot.slane %v385, %v391
    %v393 = vcombine.low %v381, %v382
    %v395 = vunpack.c.l.s4 1983009808
    %v396 = vunpack.c.0.s8 %v395
    %v397 = vlaneseq
    %v398 = vshrl.u32 %v397, 7
    %v399 = vsub.s32 %v396, %v398
    %v400 = vrot.slane %v393, %v399
    %v401 = vcombine.low %v373, %v380
    %v403 = vunpack.c.l.s4 1983009808
    %v404 = vunpack.c.0.s8 %v403
    %v405 = vlaneseq
    %v406 = vshrl.u32 %v405, 7
    %v407 = vsub.s32 %v404, %v406
    %v408 = vrot.slane %v401, %v407
    %v409 = vcombine.low %v383, %v384
    %v411 = vunpack.c.l.s4 1983009808
    %v412 = vunpack.c.0.s8 %v411
    %v413 = vlaneseq
    %v414 = vshrl.u32 %v413, 7
    %v415 = vsub.s32 %v412, %v414
    %v416 = vrot.slane %v409, %v415
    %v417 = vcombine.low %v392, %v400
    %v418 = vcombine.high %v392, %v400
    %v420 = vunpack.c.l.s4 1934713408
    %v421 = vunpack.c.0.s8 %v420
    %v422 = vlaneseq
    %v423 = vshrl.u32 %v422, 7
    %v424 = vsub.s32 %v421, %v423
    %v425 = vrot.slane %v417, %v424
    %v427 = vunpack.c.l.s4 1934713408
    %v428 = vunpack.c.0.s8 %v427
    %v429 = vlaneseq
    %v430 = vshrl.u32 %v429, 7
    %v431 = vsub.s32 %v428, %v430
    %v432 = vrot.slane %v418, %v431
    %v433 = vcombine.low %v408, %v416
    %v434 = vcombine.high %v408, %v416
    %v436 = vunpack.c.l.s4 1934713408
    %v437 = vunpack.c.0.s8 %v436
    %v438 = vlaneseq
    %v439 = vshrl.u32 %v438, 7
    %v440 = vsub.s32 %v437, %v439
    %v441 = vrot.slane %v433, %v440
    %v443 = vunpack.c.l.s4 1934713408
    %v444 = vunpack.c.0.s8 %v443
    %v445 = vlaneseq
    %v446 = vshrl.u32 %v445, 7
    %v447 = vsub.s32 %v444, %v446
    %v448 = vrot.slane %v434, %v447
    %v449 = vcombine.low %v425, %v441
    %v450 = vcombine.high %v425, %v441
    %v451 = vcombine.low %v432, %v448
    %v452 = vcombine.high %v432, %v448
    %v453 = vpack.c.bf16 %v449, %v449
    %v454 = vpack.c.bf16 %v450, %v450
    %v455 = vpack.c.bf16 %v451, %v451
    %v456 = vpack.c.bf16 %v452, %v452
    %458 = vrot.lane.b32.xlu0 %v226, 120
    %v459 = vpop.permute.xlu0 %458
    %461 = vrot.lane.b32.xlu0 %v226, 112
    %v462 = vpop.permute.xlu0 %461
    %464 = vrot.lane.b32.xlu0 %v226, 104
    %v465 = vpop.permute.xlu0 %464
    %v467 = vcombine.low %v226, %v462
    %v468 = vcombine.high %v226, %v462
    %v470 = vunpack.c.l.s4 1983009808
    %v471 = vunpack.c.0.s8 %v470
    %v472 = vlaneseq
    %v473 = vshrl.u32 %v472, 7
    %v474 = vsub.s32 %v471, %v473
    %v475 = vrot.slane %v467, %v474
    %v477 = vunpack.c.l.s4 1983009808
    %v478 = vunpack.c.0.s8 %v477
    %v479 = vlaneseq
    %v480 = vshrl.u32 %v479, 7
    %v481 = vsub.s32 %v478, %v480
    %v482 = vrot.slane %v468, %v481
    %v483 = vcombine.low %v459, %v465
    %v484 = vcombine.high %v459, %v465
    %v486 = vunpack.c.l.s4 1983009808
    %v487 = vunpack.c.0.s8 %v486
    %v488 = vlaneseq
    %v489 = vshrl.u32 %v488, 7
    %v490 = vsub.s32 %v487, %v489
    %v491 = vrot.slane %v483, %v490
    %v493 = vunpack.c.l.s4 1983009808
    %v494 = vunpack.c.0.s8 %v493
    %v495 = vlaneseq
    %v496 = vshrl.u32 %v495, 7
    %v497 = vsub.s32 %v494, %v496
    %v498 = vrot.slane %v484, %v497
    %v499 = vcombine.low %v475, %v491
    %v500 = vcombine.high %v475, %v491
    %v502 = vunpack.c.l.s4 1934713408
    %v503 = vunpack.c.0.s8 %v502
    %v504 = vlaneseq
    %v505 = vshrl.u32 %v504, 7
    %v506 = vsub.s32 %v503, %v505
    %v507 = vrot.slane %v499, %v506
    %v509 = vunpack.c.l.s4 1934713408
    %v510 = vunpack.c.0.s8 %v509
    %v511 = vlaneseq
    %v512 = vshrl.u32 %v511, 7
    %v513 = vsub.s32 %v510, %v512
    %v514 = vrot.slane %v500, %v513
    %v515 = vcombine.low %v482, %v498
    %v516 = vcombine.high %v482, %v498
    %v518 = vunpack.c.l.s4 1934713408
    %v519 = vunpack.c.0.s8 %v518
    %v520 = vlaneseq
    %v521 = vshrl.u32 %v520, 7
    %v522 = vsub.s32 %v519, %v521
    %v523 = vrot.slane %v515, %v522
    %v525 = vunpack.c.l.s4 1934713408
    %v526 = vunpack.c.0.s8 %v525
    %v527 = vlaneseq
    %v528 = vshrl.u32 %v527, 7
    %v529 = vsub.s32 %v526, %v528
    %v530 = vrot.slane %v516, %v529
    %v531 = vcombine.high %v507, 0.0
    %v532 = vcombine.high %v514, 0.0
    %v533 = vcombine.high %v523, 0.0
    %v534 = vcombine.high %v530, 0.0
    %v535 = vcombine.low %v507, %v514
    %v537 = vunpack.c.l.s4 1983009808
    %v538 = vunpack.c.0.s8 %v537
    %v539 = vlaneseq
    %v540 = vshrl.u32 %v539, 7
    %v541 = vsub.s32 %v538, %v540
    %v542 = vrot.slane %v535, %v541
    %v543 = vcombine.low %v531, %v532
    %v545 = vunpack.c.l.s4 1983009808
    %v546 = vunpack.c.0.s8 %v545
    %v547 = vlaneseq
    %v548 = vshrl.u32 %v547, 7
    %v549 = vsub.s32 %v546, %v548
    %v550 = vrot.slane %v543, %v549
    %v551 = vcombine.low %v523, %v530
    %v553 = vunpack.c.l.s4 1983009808
    %v554 = vunpack.c.0.s8 %v553
    %v555 = vlaneseq
    %v556 = vshrl.u32 %v555, 7
    %v557 = vsub.s32 %v554, %v556
    %v558 = vrot.slane %v551, %v557
    %v559 = vcombine.low %v533, %v534
    %v561 = vunpack.c.l.s4 1983009808
    %v562 = vunpack.c.0.s8 %v561
    %v563 = vlaneseq
    %v564 = vshrl.u32 %v563, 7
    %v565 = vsub.s32 %v562, %v564
    %v566 = vrot.slane %v559, %v565
    %v567 = vcombine.low %v542, %v550
    %v568 = vcombine.high %v542, %v550
    %v570 = vunpack.c.l.s4 1934713408
    %v571 = vunpack.c.0.s8 %v570
    %v572 = vlaneseq
    %v573 = vshrl.u32 %v572, 7
    %v574 = vsub.s32 %v571, %v573
    %v575 = vrot.slane %v567, %v574
    %v577 = vunpack.c.l.s4 1934713408
    %v578 = vunpack.c.0.s8 %v577
    %v579 = vlaneseq
    %v580 = vshrl.u32 %v579, 7
    %v581 = vsub.s32 %v578, %v580
    %v582 = vrot.slane %v568, %v581
    %v583 = vcombine.low %v558, %v566
    %v584 = vcombine.high %v558, %v566
    %v586 = vunpack.c.l.s4 1934713408
    %v587 = vunpack.c.0.s8 %v586
    %v588 = vlaneseq
    %v589 = vshrl.u32 %v588, 7
    %v590 = vsub.s32 %v587, %v589
    %v591 = vrot.slane %v583, %v590
    %v593 = vunpack.c.l.s4 1934713408
    %v594 = vunpack.c.0.s8 %v593
    %v595 = vlaneseq
    %v596 = vshrl.u32 %v595, 7
    %v597 = vsub.s32 %v594, %v596
    %v598 = vrot.slane %v584, %v597
    %v599 = vcombine.low %v575, %v591
    %v600 = vcombine.high %v575, %v591
    %v601 = vcombine.low %v582, %v598
    %v602 = vcombine.high %v582, %v598
    %v603 = vpack.c.bf16 %v599, %v599
    %v604 = vpack.c.bf16 %v600, %v600
    %v605 = vpack.c.bf16 %v601, %v601
    %v606 = vpack.c.bf16 %v602, %v602
    %608 = vrot.lane.b32.xlu0 %v290, 120
    %v609 = vpop.permute.xlu0 %608
    %611 = vrot.lane.b32.xlu0 %v290, 112
    %v612 = vpop.permute.xlu0 %611
    %614 = vrot.lane.b32.xlu0 %v290, 104
    %v615 = vpop.permute.xlu0 %614
    %v617 = vcombine.low %v290, %v612
    %v618 = vcombine.high %v290, %v612
    %v620 = vunpack.c.l.s4 1983009808
    %v621 = vunpack.c.0.s8 %v620
    %v622 = vlaneseq
    %v623 = vshrl.u32 %v622, 7
    %v624 = vsub.s32 %v621, %v623
    %v625 = vrot.slane %v617, %v624
    %v627 = vunpack.c.l.s4 1983009808
    %v628 = vunpack.c.0.s8 %v627
    %v629 = vlaneseq
    %v630 = vshrl.u32 %v629, 7
    %v631 = vsub.s32 %v628, %v630
    %v632 = vrot.slane %v618, %v631
    %v633 = vcombine.low %v609, %v615
    %v634 = vcombine.high %v609, %v615
    %v636 = vunpack.c.l.s4 1983009808
    %v637 = vunpack.c.0.s8 %v636
    %v638 = vlaneseq
    %v639 = vshrl.u32 %v638, 7
    %v640 = vsub.s32 %v637, %v639
    %v641 = vrot.slane %v633, %v640
    %v643 = vunpack.c.l.s4 1983009808
    %v644 = vunpack.c.0.s8 %v643
    %v645 = vlaneseq
    %v646 = vshrl.u32 %v645, 7
    %v647 = vsub.s32 %v644, %v646
    %v648 = vrot.slane %v634, %v647
    %v649 = vcombine.low %v625, %v641
    %v650 = vcombine.high %v625, %v641
    %v652 = vunpack.c.l.s4 1934713408
    %v653 = vunpack.c.0.s8 %v652
    %v654 = vlaneseq
    %v655 = vshrl.u32 %v654, 7
    %v656 = vsub.s32 %v653, %v655
    %v657 = vrot.slane %v649, %v656
    %v659 = vunpack.c.l.s4 1934713408
    %v660 = vunpack.c.0.s8 %v659
    %v661 = vlaneseq
    %v662 = vshrl.u32 %v661, 7
    %v663 = vsub.s32 %v660, %v662
    %v664 = vrot.slane %v650, %v663
    %v665 = vcombine.low %v632, %v648
    %v666 = vcombine.high %v632, %v648
    %v668 = vunpack.c.l.s4 1934713408
    %v669 = vunpack.c.0.s8 %v668
    %v670 = vlaneseq
    %v671 = vshrl.u32 %v670, 7
    %v672 = vsub.s32 %v669, %v671
    %v673 = vrot.slane %v665, %v672
    %v675 = vunpack.c.l.s4 1934713408
    %v676 = vunpack.c.0.s8 %v675
    %v677 = vlaneseq
    %v678 = vshrl.u32 %v677, 7
    %v679 = vsub.s32 %v676, %v678
    %v680 = vrot.slane %v666, %v679
    %v681 = vcombine.high %v657, 0.0
    %v682 = vcombine.high %v664, 0.0
    %v683 = vcombine.high %v673, 0.0
    %v684 = vcombine.high %v680, 0.0
    %v685 = vcombine.low %v657, %v664
    %v687 = vunpack.c.l.s4 1983009808
    %v688 = vunpack.c.0.s8 %v687
    %v689 = vlaneseq
    %v690 = vshrl.u32 %v689, 7
    %v691 = vsub.s32 %v688, %v690
    %v692 = vrot.slane %v685, %v691
    %v693 = vcombine.low %v681, %v682
    %v695 = vunpack.c.l.s4 1983009808
    %v696 = vunpack.c.0.s8 %v695
    %v697 = vlaneseq
    %v698 = vshrl.u32 %v697, 7
    %v699 = vsub.s32 %v696, %v698
    %v700 = vrot.slane %v693, %v699
    %v701 = vcombine.low %v673, %v680
    %v703 = vunpack.c.l.s4 1983009808
    %v704 = vunpack.c.0.s8 %v703
    %v705 = vlaneseq
    %v706 = vshrl.u32 %v705, 7
    %v707 = vsub.s32 %v704, %v706
    %v708 = vrot.slane %v701, %v707
    %v709 = vcombine.low %v683, %v684
    %v711 = vunpack.c.l.s4 1983009808
    %v712 = vunpack.c.0.s8 %v711
    %v713 = vlaneseq
    %v714 = vshrl.u32 %v713, 7
    %v715 = vsub.s32 %v712, %v714
    %v716 = vrot.slane %v709, %v715
    %v717 = vcombine.low %v692, %v700
    %v718 = vcombine.high %v692, %v700
    %v720 = vunpack.c.l.s4 1934713408
    %v721 = vunpack.c.0.s8 %v720
    %v722 = vlaneseq
    %v723 = vshrl.u32 %v722, 7
    %v724 = vsub.s32 %v721, %v723
    %v725 = vrot.slane %v717, %v724
    %v727 = vunpack.c.l.s4 1934713408
    %v728 = vunpack.c.0.s8 %v727
    %v729 = vlaneseq
    %v730 = vshrl.u32 %v729, 7
    %v731 = vsub.s32 %v728, %v730
    %v732 = vrot.slane %v718, %v731
    %v733 = vcombine.low %v708, %v716
    %v734 = vcombine.high %v708, %v716
    %v736 = vunpack.c.l.s4 1934713408
    %v737 = vunpack.c.0.s8 %v736
    %v738 = vlaneseq
    %v739 = vshrl.u32 %v738, 7
    %v740 = vsub.s32 %v737, %v739
    %v741 = vrot.slane %v733, %v740
    %v743 = vunpack.c.l.s4 1934713408
    %v744 = vunpack.c.0.s8 %v743
    %v745 = vlaneseq
    %v746 = vshrl.u32 %v745, 7
    %v747 = vsub.s32 %v744, %v746
    %v748 = vrot.slane %v734, %v747
    %v749 = vcombine.low %v725, %v741
    %v750 = vcombine.high %v725, %v741
    %v751 = vcombine.low %v732, %v748
    %v752 = vcombine.high %v732, %v748
    %v753 = vpack.c.bf16 %v749, %v749
    %v754 = vpack.c.bf16 %v750, %v750
    %v755 = vpack.c.bf16 %v751, %v751
    %v756 = vpack.c.bf16 %v752, %v752
    %vm757 = vcmask 64512
    %v759 = vsel %vm757, %v453, 0
    %v762 = vsel %vm757, %v603, 0
    %764 = vmatprep.subr.bf16.mxu0 0
    %765 = vmatpush1.bf16.xpose.msra.mxu0 %v762
    %766 = vmatprep.subr.bf16.mxu0 0
    %767 = vmatpush1.bf16.xpose.msra.mxu0 0
    %768 = vmatprep.subr.bf16.mxu0 0
    %769 = vmatpush1.bf16.xpose.msra.mxu0 0
    %770 = vmatprep.subr.bf16.mxu0 0
    %771 = vmatpush1.bf16.xpose.msra.mxu0 0
    %772 = vmatprep.subr.bf16.mxu0 0
    %773 = vmatpush1.bf16.xpose.msra.mxu0 0
    %774 = vmatprep.subr.bf16.mxu0 0
    %775 = vmatpush1.bf16.xpose.msra.mxu0 0
    %776 = vmatprep.subr.bf16.mxu0 0
    %777 = vmatpush1.bf16.xpose.msra.mxu0 0
    %778 = vmatprep.subr.bf16.mxu0 0
    %779 = vmatpush1.bf16.xpose.msra.mxu0 0
    %780 = vmatprep.subr.bf16.mxu0 0
    %781 = vmatpush1.bf16.xpose.msra.mxu0 0
    %782 = vmatprep.subr.bf16.mxu0 0
    %783 = vmatpush1.bf16.xpose.msra.mxu0 0
    %784 = vmatprep.subr.bf16.mxu0 0
    %785 = vmatpush1.bf16.xpose.msra.mxu0 0
    %786 = vmatprep.subr.bf16.mxu0 0
    %787 = vmatpush1.bf16.xpose.msra.mxu0 0
    %788 = vmatprep.subr.bf16.mxu0 0
    %789 = vmatpush1.bf16.xpose.msra.mxu0 0
    %790 = vmatprep.subr.bf16.mxu0 0
    %791 = vmatpush1.bf16.xpose.msra.mxu0 0
    %792 = vmatprep.subr.bf16.mxu0 0
    %793 = vmatpush1.bf16.xpose.msra.mxu0 0
    %794 = vmatprep.subr.bf16.mxu0 0
    %795 = vmatpush1.bf16.xpose.msra.mxu0 0
    %796 = vmatprep.mubr.bf16.mxu0 0
    %797 = vmatmul.mubr.bf16.gmra.mrb[0].mxu0 %v759
    %v798 = vpop.f32.mrb[0].mxu0
    %v799 = vadd.f32 %v301, %v798
    %v800 = vpop.f32.mrb[0].mxu0
    %v801 = vpop.f32.mrb[0].mxu0
    %v802 = vpop.f32.mrb[0].mxu0
    %803 = vdwg.mxu0
    %v805 = vsel %vm757, %v454, 0
    %v808 = vsel %vm757, %v604, 0
    %810 = vmatprep.subr.bf16.mxu0 0
    %811 = vmatpush1.bf16.xpose.msra.mxu0 %v808
    %812 = vmatprep.subr.bf16.mxu0 0
    %813 = vmatpush1.bf16.xpose.msra.mxu0 0
    %814 = vmatprep.subr.bf16.mxu0 0
    %815 = vmatpush1.bf16.xpose.msra.mxu0 0
    %816 = vmatprep.subr.bf16.mxu0 0
    %817 = vmatpush1.bf16.xpose.msra.mxu0 0
    %818 = vmatprep.subr.bf16.mxu0 0
    %819 = vmatpush1.bf16.xpose.msra.mxu0 0
    %820 = vmatprep.subr.bf16.mxu0 0
    %821 = vmatpush1.bf16.xpose.msra.mxu0 0
    %822 = vmatprep.subr.bf16.mxu0 0
    %823 = vmatpush1.bf16.xpose.msra.mxu0 0
    %824 = vmatprep.subr.bf16.mxu0 0
    %825 = vmatpush1.bf16.xpose.msra.mxu0 0
    %826 = vmatprep.subr.bf16.mxu0 0
    %827 = vmatpush1.bf16.xpose.msra.mxu0 0
    %828 = vmatprep.subr.bf16.mxu0 0
    %829 = vmatpush1.bf16.xpose.msra.mxu0 0
    %830 = vmatprep.subr.bf16.mxu0 0
    %831 = vmatpush1.bf16.xpose.msra.mxu0 0
    %832 = vmatprep.subr.bf16.mxu0 0
    %833 = vmatpush1.bf16.xpose.msra.mxu0 0
    %834 = vmatprep.subr.bf16.mxu0 0
    %835 = vmatpush1.bf16.xpose.msra.mxu0 0
    %836 = vmatprep.subr.bf16.mxu0 0
    %837 = vmatpush1.bf16.xpose.msra.mxu0 0
    %838 = vmatprep.subr.bf16.mxu0 0
    %839 = vmatpush1.bf16.xpose.msra.mxu0 0
    %840 = vmatprep.subr.bf16.mxu0 0
    %841 = vmatpush1.bf16.xpose.msra.mxu0 0
    %842 = vmatprep.mubr.bf16.mxu0 0
    %843 = vmatmul.mubr.bf16.gmra.mrb[0].mxu0 %v805
    %v844 = vpop.f32.mrb[0].mxu0
    %v845 = vadd.f32 %v301, %v844
    %v846 = vpop.f32.mrb[0].mxu0
    %v847 = vpop.f32.mrb[0].mxu0
    %v848 = vpop.f32.mrb[0].mxu0
    %849 = vdwg.mxu0
    %v851 = vsel %vm757, %v455, 0
    %v854 = vsel %vm757, %v605, 0
    %856 = vmatprep.subr.bf16.mxu0 0
    %857 = vmatpush1.bf16.xpose.msra.mxu0 %v854
    %858 = vmatprep.subr.bf16.mxu0 0
    %859 = vmatpush1.bf16.xpose.msra.mxu0 0
    %860 = vmatprep.subr.bf16.mxu0 0
    %861 = vmatpush1.bf16.xpose.msra.mxu0 0
    %862 = vmatprep.subr.bf16.mxu0 0
    %863 = vmatpush1.bf16.xpose.msra.mxu0 0
    %864 = vmatprep.subr.bf16.mxu0 0
    %865 = vmatpush1.bf16.xpose.msra.mxu0 0
    %866 = vmatprep.subr.bf16.mxu0 0
    %867 = vmatpush1.bf16.xpose.msra.mxu0 0
    %868 = vmatprep.subr.bf16.mxu0 0
    %869 = vmatpush1.bf16.xpose.msra.mxu0 0
    %870 = vmatprep.subr.bf16.mxu0 0
    %871 = vmatpush1.bf16.xpose.msra.mxu0 0
    %872 = vmatprep.subr.bf16.mxu0 0
    %873 = vmatpush1.bf16.xpose.msra.mxu0 0
    %874 = vmatprep.subr.bf16.mxu0 0
    %875 = vmatpush1.bf16.xpose.msra.mxu0 0
    %876 = vmatprep.subr.bf16.mxu0 0
    %877 = vmatpush1.bf16.xpose.msra.mxu0 0
    %878 = vmatprep.subr.bf16.mxu0 0
    %879 = vmatpush1.bf16.xpose.msra.mxu0 0
    %880 = vmatprep.subr.bf16.mxu0 0
    %881 = vmatpush1.bf16.xpose.msra.mxu0 0
    %882 = vmatprep.subr.bf16.mxu0 0
    %883 = vmatpush1.bf16.xpose.msra.mxu0 0
    %884 = vmatprep.subr.bf16.mxu0 0
    %885 = vmatpush1.bf16.xpose.msra.mxu0 0
    %886 = vmatprep.subr.bf16.mxu0 0
    %887 = vmatpush1.bf16.xpose.msra.mxu0 0
    %888 = vmatprep.mubr.bf16.mxu0 0
    %889 = vmatmul.mubr.bf16.gmra.mrb[0].mxu0 %v851
    %v890 = vpop.f32.mrb[0].mxu0
    %v891 = vadd.f32 %v301, %v890
    %v892 = vpop.f32.mrb[0].mxu0
    %v893 = vpop.f32.mrb[0].mxu0
    %v894 = vpop.f32.mrb[0].mxu0
    %895 = vdwg.mxu0
    %v897 = vsel %vm757, %v456, 0
    %v900 = vsel %vm757, %v606, 0
    %902 = vmatprep.subr.bf16.mxu0 0
    %903 = vmatpush1.bf16.xpose.msra.mxu0 %v900
    %904 = vmatprep.subr.bf16.mxu0 0
    %905 = vmatpush1.bf16.xpose.msra.mxu0 0
    %906 = vmatprep.subr.bf16.mxu0 0
    %907 = vmatpush1.bf16.xpose.msra.mxu0 0
    %908 = vmatprep.subr.bf16.mxu0 0
    %909 = vmatpush1.bf16.xpose.msra.mxu0 0
    %910 = vmatprep.subr.bf16.mxu0 0
    %911 = vmatpush1.bf16.xpose.msra.mxu0 0
    %912 = vmatprep.subr.bf16.mxu0 0
    %913 = vmatpush1.bf16.xpose.msra.mxu0 0
    %914 = vmatprep.subr.bf16.mxu0 0
    %915 = vmatpush1.bf16.xpose.msra.mxu0 0
    %916 = vmatprep.subr.bf16.mxu0 0
    %917 = vmatpush1.bf16.xpose.msra.mxu0 0
    %918 = vmatprep.subr.bf16.mxu0 0
    %919 = vmatpush1.bf16.xpose.msra.mxu0 0
    %920 = vmatprep.subr.bf16.mxu0 0
    %921 = vmatpush1.bf16.xpose.msra.mxu0 0
    %922 = vmatprep.subr.bf16.mxu0 0
    %923 = vmatpush1.bf16.xpose.msra.mxu0 0
    %924 = vmatprep.subr.bf16.mxu0 0
    %925 = vmatpush1.bf16.xpose.msra.mxu0 0
    %926 = vmatprep.subr.bf16.mxu0 0
    %927 = vmatpush1.bf16.xpose.msra.mxu0 0
    %928 = vmatprep.subr.bf16.mxu0 0
    %929 = vmatpush1.bf16.xpose.msra.mxu0 0
    %930 = vmatprep.subr.bf16.mxu0 0
    %931 = vmatpush1.bf16.xpose.msra.mxu0 0
    %932 = vmatprep.subr.bf16.mxu0 0
    %933 = vmatpush1.bf16.xpose.msra.mxu0 0
    %934 = vmatprep.mubr.bf16.mxu0 0
    %935 = vmatmul.mubr.bf16.gmra.mrb[0].mxu0 %v897
    %v936 = vpop.f32.mrb[0].mxu0
    %v937 = vadd.f32 %v301, %v936
    %v938 = vpop.f32.mrb[0].mxu0
    %v939 = vpop.f32.mrb[0].mxu0
    %v940 = vpop.f32.mrb[0].mxu0
    %941 = vdwg.mxu0
    %v942 = vsel %vm757, %v799, -inf
    %943 = vmax.xlane.f32.xlu0 %v942
    %v944 = vpop.xlane.xlu0 %943
    %v945 = vsel %vm757, %v845, -inf
    %946 = vmax.xlane.f32.xlu0 %v945
    %v947 = vpop.xlane.xlu0 %946
    %v948 = vsel %vm757, %v891, -inf
    %949 = vmax.xlane.f32.xlu0 %v948
    %v950 = vpop.xlane.xlu0 %949
    %v951 = vsel %vm757, %v937, -inf
    %952 = vmax.xlane.f32.xlu0 %v951
    %v953 = vpop.xlane.xlu0 %952
    %v954 = vsub.f32 %v799, %v944
    %v955 = vsub.f32 %v845, %v947
    %v956 = vsub.f32 %v891, %v950
    %v957 = vsub.f32 %v937, %v953
    %v958 = vmul.f32 %v954, 1.442695
    %v959 = vpow.pop %v958
    %v960 = vmul.f32 %v955, 1.442695
    %v961 = vpow.pop %v960
    %v962 = vmul.f32 %v956, 1.442695
    %v963 = vpow.pop %v962
    %v964 = vmul.f32 %v957, 1.442695
    %v965 = vpow.pop %v964
    %v966 = vsel %vm757, %v959, 0.0
    %967 = vadd.xlane.f32.xlu0 %v966
    %v968 = vpop.xlane.xlu0 %967
    %v969 = vsel %vm757, %v961, 0.0
    %970 = vadd.xlane.f32.xlu0 %v969
    %v971 = vpop.xlane.xlu0 %970
    %v972 = vsel %vm757, %v963, 0.0
    %973 = vadd.xlane.f32.xlu0 %v972
    %v974 = vpop.xlane.xlu0 %973
    %v975 = vsel %vm757, %v965, 0.0
    %976 = vadd.xlane.f32.xlu0 %v975
    %v977 = vpop.xlane.xlu0 %976
    %v978 = vpack.c.bf16 %v959, %v959
    %v979 = vpack.c.bf16 %v961, %v961
    %v980 = vpack.c.bf16 %v963, %v963
    %v981 = vpack.c.bf16 %v965, %v965
    %v983 = vsel %vm757, %v978, 0
    %vm985 = vcmask 1043456
    %v987 = vsel %vm985, %v753, 0
    %989 = vmatprep.subr.bf16.mxu0 0
    %990 = vmatpush1.bf16.msra.mxu0 %v987
    %991 = vmatprep.subr.bf16.mxu0 0
    %992 = vmatpush1.bf16.msra.mxu0 0
    %993 = vmatprep.subr.bf16.mxu0 0
    %994 = vmatpush1.bf16.msra.mxu0 0
    %995 = vmatprep.subr.bf16.mxu0 0
    %996 = vmatpush1.bf16.msra.mxu0 0
    %997 = vmatprep.subr.bf16.mxu0 0
    %998 = vmatpush1.bf16.msra.mxu0 0
    %999 = vmatprep.subr.bf16.mxu0 0
    %1000 = vmatpush1.bf16.msra.mxu0 0
    %1001 = vmatprep.subr.bf16.mxu0 0
    %1002 = vmatpush1.bf16.msra.mxu0 0
    %1003 = vmatprep.subr.bf16.mxu0 0
    %1004 = vmatpush1.bf16.msra.mxu0 0
    %1005 = vmatprep.subr.bf16.mxu0 0
    %1006 = vmatpush1.bf16.msra.mxu0 0
    %1007 = vmatprep.subr.bf16.mxu0 0
    %1008 = vmatpush1.bf16.msra.mxu0 0
    %1009 = vmatprep.subr.bf16.mxu0 0
    %1010 = vmatpush1.bf16.msra.mxu0 0
    %1011 = vmatprep.subr.bf16.mxu0 0
    %1012 = vmatpush1.bf16.msra.mxu0 0
    %1013 = vmatprep.subr.bf16.mxu0 0
    %1014 = vmatpush1.bf16.msra.mxu0 0
    %1015 = vmatprep.subr.bf16.mxu0 0
    %1016 = vmatpush1.bf16.msra.mxu0 0
    %1017 = vmatprep.subr.bf16.mxu0 0
    %1018 = vmatpush1.bf16.msra.mxu0 0
    %1019 = vmatprep.subr.bf16.mxu0 0
    %1020 = vmatpush1.bf16.msra.mxu0 0
    %1021 = vmatprep.mubr.bf16.mxu0 0
    %1022 = vmatmul.mubr.bf16.gmra.mrb[0].mxu0 %v983
    %v1023 = vpop.f32.mrb[0].mxu0
    %v1024 = vadd.f32 0.0, %v1023
    %v1025 = vpop.f32.mrb[0].mxu0
    %v1026 = vpop.f32.mrb[0].mxu0
    %v1027 = vpop.f32.mrb[0].mxu0
    %1028 = vdwg.mxu0
    %v1030 = vsel %vm757, %v979, 0
    %v1033 = vsel %vm985, %v754, 0
    %1035 = vmatprep.subr.bf16.mxu0 0
    %1036 = vmatpush1.bf16.msra.mxu0 %v1033
    %1037 = vmatprep.subr.bf16.mxu0 0
    %1038 = vmatpush1.bf16.msra.mxu0 0
    %1039 = vmatprep.subr.bf16.mxu0 0
    %1040 = vmatpush1.bf16.msra.mxu0 0
    %1041 = vmatprep.subr.bf16.mxu0 0
    %1042 = vmatpush1.bf16.msra.mxu0 0
    %1043 = vmatprep.subr.bf16.mxu0 0
    %1044 = vmatpush1.bf16.msra.mxu0 0
    %1045 = vmatprep.subr.bf16.mxu0 0
    %1046 = vmatpush1.bf16.msra.mxu0 0
    %1047 = vmatprep.subr.bf16.mxu0 0
    %1048 = vmatpush1.bf16.msra.mxu0 0
    %1049 = vmatprep.subr.bf16.mxu0 0
    %1050 = vmatpush1.bf16.msra.mxu0 0
    %1051 = vmatprep.subr.bf16.mxu0 0
    %1052 = vmatpush1.bf16.msra.mxu0 0
    %1053 = vmatprep.subr.bf16.mxu0 0
    %1054 = vmatpush1.bf16.msra.mxu0 0
    %1055 = vmatprep.subr.bf16.mxu0 0
    %1056 = vmatpush1.bf16.msra.mxu0 0
    %1057 = vmatprep.subr.bf16.mxu0 0
    %1058 = vmatpush1.bf16.msra.mxu0 0
    %1059 = vmatprep.subr.bf16.mxu0 0
    %1060 = vmatpush1.bf16.msra.mxu0 0
    %1061 = vmatprep.subr.bf16.mxu0 0
    %1062 = vmatpush1.bf16.msra.mxu0 0
    %1063 = vmatprep.subr.bf16.mxu0 0
    %1064 = vmatpush1.bf16.msra.mxu0 0
    %1065 = vmatprep.subr.bf16.mxu0 0
    %1066 = vmatpush1.bf16.msra.mxu0 0
    %1067 = vmatprep.mubr.bf16.mxu0 0
    %1068 = vmatmul.mubr.bf16.gmra.mrb[0].mxu0 %v1030
    %v1069 = vpop.f32.mrb[0].mxu0
    %v1070 = vadd.f32 0.0, %v1069
    %v1071 = vpop.f32.mrb[0].mxu0
    %v1072 = vpop.f32.mrb[0].mxu0
    %v1073 = vpop.f32.mrb[0].mxu0
    %1074 = vdwg.mxu0
    %v1076 = vsel %vm757, %v980, 0
    %v1079 = vsel %vm985, %v755, 0
    %1081 = vmatprep.subr.bf16.mxu0 0
    %1082 = vmatpush1.bf16.msra.mxu0 %v1079
    %1083 = vmatprep.subr.bf16.mxu0 0
    %1084 = vmatpush1.bf16.msra.mxu0 0
    %1085 = vmatprep.subr.bf16.mxu0 0
    %1086 = vmatpush1.bf16.msra.mxu0 0
    %1087 = vmatprep.subr.bf16.mxu0 0
    %1088 = vmatpush1.bf16.msra.mxu0 0
    %1089 = vmatprep.subr.bf16.mxu0 0
    %1090 = vmatpush1.bf16.msra.mxu0 0
    %1091 = vmatprep.subr.bf16.mxu0 0
    %1092 = vmatpush1.bf16.msra.mxu0 0
    %1093 = vmatprep.subr.bf16.mxu0 0
    %1094 = vmatpush1.bf16.msra.mxu0 0
    %1095 = vmatprep.subr.bf16.mxu0 0
    %1096 = vmatpush1.bf16.msra.mxu0 0
    %1097 = vmatprep.subr.bf16.mxu0 0
    %1098 = vmatpush1.bf16.msra.mxu0 0
    %1099 = vmatprep.subr.bf16.mxu0 0
    %1100 = vmatpush1.bf16.msra.mxu0 0
    %1101 = vmatprep.subr.bf16.mxu0 0
    %1102 = vmatpush1.bf16.msra.mxu0 0
    %1103 = vmatprep.subr.bf16.mxu0 0
    %1104 = vmatpush1.bf16.msra.mxu0 0
    %1105 = vmatprep.subr.bf16.mxu0 0
    %1106 = vmatpush1.bf16.msra.mxu0 0
    %1107 = vmatprep.subr.bf16.mxu0 0
    %1108 = vmatpush1.bf16.msra.mxu0 0
    %1109 = vmatprep.subr.bf16.mxu0 0
    %1110 = vmatpush1.bf16.msra.mxu0 0
    %1111 = vmatprep.subr.bf16.mxu0 0
    %1112 = vmatpush1.bf16.msra.mxu0 0
    %1113 = vmatprep.mubr.bf16.mxu0 0
    %1114 = vmatmul.mubr.bf16.gmra.mrb[0].mxu0 %v1076
    %v1115 = vpop.f32.mrb[0].mxu0
    %v1116 = vadd.f32 0.0, %v1115
    %v1117 = vpop.f32.mrb[0].mxu0
    %v1118 = vpop.f32.mrb[0].mxu0
    %v1119 = vpop.f32.mrb[0].mxu0
    %1120 = vdwg.mxu0
    %v1122 = vsel %vm757, %v981, 0
    %v1125 = vsel %vm985, %v756, 0
    %1127 = vmatprep.subr.bf16.mxu0 0
    %1128 = vmatpush1.bf16.msra.mxu0 %v1125
    %1129 = vmatprep.subr.bf16.mxu0 0
    %1130 = vmatpush1.bf16.msra.mxu0 0
    %1131 = vmatprep.subr.bf16.mxu0 0
    %1132 = vmatpush1.bf16.msra.mxu0 0
    %1133 = vmatprep.subr.bf16.mxu0 0
    %1134 = vmatpush1.bf16.msra.mxu0 0
    %1135 = vmatprep.subr.bf16.mxu0 0
    %1136 = vmatpush1.bf16.msra.mxu0 0
    %1137 = vmatprep.subr.bf16.mxu0 0
    %1138 = vmatpush1.bf16.msra.mxu0 0
    %1139 = vmatprep.subr.bf16.mxu0 0
    %1140 = vmatpush1.bf16.msra.mxu0 0
    %1141 = vmatprep.subr.bf16.mxu0 0
    %1142 = vmatpush1.bf16.msra.mxu0 0
    %1143 = vmatprep.subr.bf16.mxu0 0
    %1144 = vmatpush1.bf16.msra.mxu0 0
    %1145 = vmatprep.subr.bf16.mxu0 0
    %1146 = vmatpush1.bf16.msra.mxu0 0
    %1147 = vmatprep.subr.bf16.mxu0 0
    %1148 = vmatpush1.bf16.msra.mxu0 0
    %1149 = vmatprep.subr.bf16.mxu0 0
    %1150 = vmatpush1.bf16.msra.mxu0 0
    %1151 = vmatprep.subr.bf16.mxu0 0
    %1152 = vmatpush1.bf16.msra.mxu0 0
    %1153 = vmatprep.subr.bf16.mxu0 0
    %1154 = vmatpush1.bf16.msra.mxu0 0
    %1155 = vmatprep.subr.bf16.mxu0 0
    %1156 = vmatpush1.bf16.msra.mxu0 0
    %1157 = vmatprep.subr.bf16.mxu0 0
    %1158 = vmatpush1.bf16.msra.mxu0 0
    %1159 = vmatprep.mubr.bf16.mxu0 0
    %1160 = vmatmul.mubr.bf16.gmra.mrb[0].mxu0 %v1122
    %v1161 = vpop.f32.mrb[0].mxu0
    %v1162 = vadd.f32 0.0, %v1161
    %v1163 = vpop.f32.mrb[0].mxu0
    %v1164 = vpop.f32.mrb[0].mxu0
    %v1165 = vpop.f32.mrb[0].mxu0
    %1166 = vdwg.mxu0
    %v1167 = vrcp.pop %v968
    %v1168 = vmul.f32 %v1024, %v1167
    %v1169 = vrcp.pop %v971
    %v1170 = vmul.f32 %v1070, %v1169
    %v1171 = vrcp.pop %v974
    %v1172 = vmul.f32 %v1116, %v1171
    %v1173 = vrcp.pop %v977
    %v1174 = vmul.f32 %v1162, %v1173
    %v1175 = vpack.c.bf16 %v1168, %v1168
    %v1176 = vpack.c.bf16 %v1170, %v1170
    %v1177 = vpack.c.bf16 %v1172, %v1172
    %v1178 = vpack.c.bf16 %v1174, %v1174
    %v1180 = vsel %vm757, %v1175, 0
    %v1183 = vsel %vm985, %v302, 0
    %1185 = vmatprep.subr.bf16.mxu0 0
    %1186 = vmatpush1.bf16.msra.mxu0 %v1183
    %1187 = vmatprep.subr.bf16.mxu0 0
    %1188 = vmatpush1.bf16.msra.mxu0 0
    %1189 = vmatprep.subr.bf16.mxu0 0
    %1190 = vmatpush1.bf16.msra.mxu0 0
    %1191 = vmatprep.subr.bf16.mxu0 0
    %1192 = vmatpush1.bf16.msra.mxu0 0
    %1193 = vmatprep.subr.bf16.mxu0 0
    %1194 = vmatpush1.bf16.msra.mxu0 0
    %1195 = vmatprep.subr.bf16.mxu0 0
    %1196 = vmatpush1.bf16.msra.mxu0 0
    %1197 = vmatprep.subr.bf16.mxu0 0
    %1198 = vmatpush1.bf16.msra.mxu0 0
    %1199 = vmatprep.subr.bf16.mxu0 0
    %1200 = vmatpush1.bf16.msra.mxu0 0
    %1201 = vmatprep.subr.bf16.mxu0 0
    %1202 = vmatpush1.bf16.msra.mxu0 0
    %1203 = vmatprep.subr.bf16.mxu0 0
    %1204 = vmatpush1.bf16.msra.mxu0 0
    %1205 = vmatprep.subr.bf16.mxu0 0
    %1206 = vmatpush1.bf16.msra.mxu0 0
    %1207 = vmatprep.subr.bf16.mxu0 0
    %1208 = vmatpush1.bf16.msra.mxu0 0
    %1209 = vmatprep.subr.bf16.mxu0 0
    %1210 = vmatpush1.bf16.msra.mxu0 0
    %1211 = vmatprep.subr.bf16.mxu0 0
    %1212 = vmatpush1.bf16.msra.mxu0 0
    %1213 = vmatprep.subr.bf16.mxu0 0
    %1214 = vmatpush1.bf16.msra.mxu0 0
    %1215 = vmatprep.subr.bf16.mxu0 0
    %1216 = vmatpush1.bf16.msra.mxu0 0
    %1217 = vmatprep.mubr.bf16.mxu0 0
    %1218 = vmatmul.mubr.bf16.gmra.mrb[0].mxu0 %v1180
    %v1219 = vpop.f32.mrb[0].mxu0
    %v1220 = vadd.f32 0.0, %v1219
    %v1221 = vpop.f32.mrb[0].mxu0
    %v1222 = vpop.f32.mrb[0].mxu0
    %v1223 = vpop.f32.mrb[0].mxu0
    %1224 = vdwg.mxu0
    %v1226 = vsel %vm757, %v1176, 0
    %v1229 = vsel %vm985, %v303, 0
    %1231 = vmatprep.subr.bf16.mxu0 0
    %1232 = vmatpush1.bf16.msra.mxu0 %v1229
    %1233 = vmatprep.subr.bf16.mxu0 0
    %1234 = vmatpush1.bf16.msra.mxu0 0
    %1235 = vmatprep.subr.bf16.mxu0 0
    %1236 = vmatpush1.bf16.msra.mxu0 0
    %1237 = vmatprep.subr.bf16.mxu0 0
    %1238 = vmatpush1.bf16.msra.mxu0 0
    %1239 = vmatprep.subr.bf16.mxu0 0
    %1240 = vmatpush1.bf16.msra.mxu0 0
    %1241 = vmatprep.subr.bf16.mxu0 0
    %1242 = vmatpush1.bf16.msra.mxu0 0
    %1243 = vmatprep.subr.bf16.mxu0 0
    %1244 = vmatpush1.bf16.msra.mxu0 0
    %1245 = vmatprep.subr.bf16.mxu0 0
    %1246 = vmatpush1.bf16.msra.mxu0 0
    %1247 = vmatprep.subr.bf16.mxu0 0
    %1248 = vmatpush1.bf16.msra.mxu0 0
    %1249 = vmatprep.subr.bf16.mxu0 0
    %1250 = vmatpush1.bf16.msra.mxu0 0
    %1251 = vmatprep.subr.bf16.mxu0 0
    %1252 = vmatpush1.bf16.msra.mxu0 0
    %1253 = vmatprep.subr.bf16.mxu0 0
    %1254 = vmatpush1.bf16.msra.mxu0 0
    %1255 = vmatprep.subr.bf16.mxu0 0
    %1256 = vmatpush1.bf16.msra.mxu0 0
    %1257 = vmatprep.subr.bf16.mxu0 0
    %1258 = vmatpush1.bf16.msra.mxu0 0
    %1259 = vmatprep.subr.bf16.mxu0 0
    %1260 = vmatpush1.bf16.msra.mxu0 0
    %1261 = vmatprep.subr.bf16.mxu0 0
    %1262 = vmatpush1.bf16.msra.mxu0 0
    %1263 = vmatprep.mubr.bf16.mxu0 0
    %1264 = vmatmul.mubr.bf16.gmra.mrb[0].mxu0 %v1226
    %v1265 = vpop.f32.mrb[0].mxu0
    %v1266 = vadd.f32 0.0, %v1265
    %v1267 = vpop.f32.mrb[0].mxu0
    %v1268 = vpop.f32.mrb[0].mxu0
    %v1269 = vpop.f32.mrb[0].mxu0
    %1270 = vdwg.mxu0
    %v1272 = vsel %vm757, %v1177, 0
    %v1275 = vsel %vm985, %v304, 0
    %1277 = vmatprep.subr.bf16.mxu0 0
    %1278 = vmatpush1.bf16.msra.mxu0 %v1275
    %1279 = vmatprep.subr.bf16.mxu0 0
    %1280 = vmatpush1.bf16.msra.mxu0 0
    %1281 = vmatprep.subr.bf16.mxu0 0
    %1282 = vmatpush1.bf16.msra.mxu0 0
    %1283 = vmatprep.subr.bf16.mxu0 0
    %1284 = vmatpush1.bf16.msra.mxu0 0
    %1285 = vmatprep.subr.bf16.mxu0 0
    %1286 = vmatpush1.bf16.msra.mxu0 0
    %1287 = vmatprep.subr.bf16.mxu0 0
    %1288 = vmatpush1.bf16.msra.mxu0 0
    %1289 = vmatprep.subr.bf16.mxu0 0
    %1290 = vmatpush1.bf16.msra.mxu0 0
    %1291 = vmatprep.subr.bf16.mxu0 0
    %1292 = vmatpush1.bf16.msra.mxu0 0
    %1293 = vmatprep.subr.bf16.mxu0 0
    %1294 = vmatpush1.bf16.msra.mxu0 0
    %1295 = vmatprep.subr.bf16.mxu0 0
    %1296 = vmatpush1.bf16.msra.mxu0 0
    %1297 = vmatprep.subr.bf16.mxu0 0
    %1298 = vmatpush1.bf16.msra.mxu0 0
    %1299 = vmatprep.subr.bf16.mxu0 0
    %1300 = vmatpush1.bf16.msra.mxu0 0
    %1301 = vmatprep.subr.bf16.mxu0 0
    %1302 = vmatpush1.bf16.msra.mxu0 0
    %1303 = vmatprep.subr.bf16.mxu0 0
    %1304 = vmatpush1.bf16.msra.mxu0 0
    %1305 = vmatprep.subr.bf16.mxu0 0
    %1306 = vmatpush1.bf16.msra.mxu0 0
    %1307 = vmatprep.subr.bf16.mxu0 0
    %1308 = vmatpush1.bf16.msra.mxu0 0
    %1309 = vmatprep.mubr.bf16.mxu0 0
    %1310 = vmatmul.mubr.bf16.gmra.mrb[0].mxu0 %v1272
    %v1311 = vpop.f32.mrb[0].mxu0
    %v1312 = vadd.f32 0.0, %v1311
    %v1313 = vpop.f32.mrb[0].mxu0
    %v1314 = vpop.f32.mrb[0].mxu0
    %v1315 = vpop.f32.mrb[0].mxu0
    %1316 = vdwg.mxu0
    %v1318 = vsel %vm757, %v1178, 0
    %v1321 = vsel %vm985, %v305, 0
    %1323 = vmatprep.subr.bf16.mxu0 0
    %1324 = vmatpush1.bf16.msra.mxu0 %v1321
    %1325 = vmatprep.subr.bf16.mxu0 0
    %1326 = vmatpush1.bf16.msra.mxu0 0
    %1327 = vmatprep.subr.bf16.mxu0 0
    %1328 = vmatpush1.bf16.msra.mxu0 0
    %1329 = vmatprep.subr.bf16.mxu0 0
    %1330 = vmatpush1.bf16.msra.mxu0 0
    %1331 = vmatprep.subr.bf16.mxu0 0
    %1332 = vmatpush1.bf16.msra.mxu0 0
    %1333 = vmatprep.subr.bf16.mxu0 0
    %1334 = vmatpush1.bf16.msra.mxu0 0
    %1335 = vmatprep.subr.bf16.mxu0 0
    %1336 = vmatpush1.bf16.msra.mxu0 0
    %1337 = vmatprep.subr.bf16.mxu0 0
    %1338 = vmatpush1.bf16.msra.mxu0 0
    %1339 = vmatprep.subr.bf16.mxu0 0
    %1340 = vmatpush1.bf16.msra.mxu0 0
    %1341 = vmatprep.subr.bf16.mxu0 0
    %1342 = vmatpush1.bf16.msra.mxu0 0
    %1343 = vmatprep.subr.bf16.mxu0 0
    %1344 = vmatpush1.bf16.msra.mxu0 0
    %1345 = vmatprep.subr.bf16.mxu0 0
    %1346 = vmatpush1.bf16.msra.mxu0 0
    %1347 = vmatprep.subr.bf16.mxu0 0
    %1348 = vmatpush1.bf16.msra.mxu0 0
    %1349 = vmatprep.subr.bf16.mxu0 0
    %1350 = vmatpush1.bf16.msra.mxu0 0
    %1351 = vmatprep.subr.bf16.mxu0 0
    %1352 = vmatpush1.bf16.msra.mxu0 0
    %1353 = vmatprep.subr.bf16.mxu0 0
    %1354 = vmatpush1.bf16.msra.mxu0 0
    %1355 = vmatprep.mubr.bf16.mxu0 0
    %1356 = vmatmul.mubr.bf16.gmra.mrb[0].mxu0 %v1318
    %v1357 = vpop.f32.mrb[0].mxu0
    %v1358 = vadd.f32 0.0, %v1357
    %v1359 = vpop.f32.mrb[0].mxu0
    %v1360 = vpop.f32.mrb[0].mxu0
    %v1361 = vpop.f32.mrb[0].mxu0
    %1362 = vdwg.mxu0
    %v1363 = vadd.f32 %v1220, %v1266
    %v1364 = vadd.f32 %v1363, %v1312
    %v1365 = vadd.f32 %v1364, %v1358
    %v1367 = vlaneseq
    %v1368 = vshrl.u32 %v1367, 7
    %v1369 = vsub.s32 0, %v1368
    %v1370 = vrot.slane %v306, %v1369
    %v1372 = vadd.f32 %v1365, %v1370
    %1373 = vst [vmem:[%s9] sm:$0xff] %v1372
    %1375 = vrot.lane.b32.xlu0 %v165, 120
    %v1376 = vpop.permute.xlu0 %1375
    %1378 = vrot.lane.b32.xlu0 %v165, 112
    %v1379 = vpop.permute.xlu0 %1378
    %1381 = vrot.lane.b32.xlu0 %v165, 104
    %v1382 = vpop.permute.xlu0 %1381
    %v1384 = vcombine.low %v165, %v1379
    %v1385 = vcombine.high %v165, %v1379
    %v1387 = vunpack.c.l.s4 1983009808
    %v1388 = vunpack.c.0.s8 %v1387
    %v1389 = vlaneseq
    %v1390 = vshrl.u32 %v1389, 7
    %v1391 = vsub.s32 %v1388, %v1390
    %v1392 = vrot.slane %v1384, %v1391
    %v1394 = vunpack.c.l.s4 1983009808
    %v1395 = vunpack.c.0.s8 %v1394
    %v1396 = vlaneseq
    %v1397 = vshrl.u32 %v1396, 7
    %v1398 = vsub.s32 %v1395, %v1397
    %v1399 = vrot.slane %v1385, %v1398
    %v1400 = vcombine.low %v1376, %v1382
    %v1401 = vcombine.high %v1376, %v1382
    %v1403 = vunpack.c.l.s4 1983009808
    %v1404 = vunpack.c.0.s8 %v1403
    %v1405 = vlaneseq
    %v1406 = vshrl.u32 %v1405, 7
    %v1407 = vsub.s32 %v1404, %v1406
    %v1408 = vrot.slane %v1400, %v1407
    %v1410 = vunpack.c.l.s4 1983009808
    %v1411 = vunpack.c.0.s8 %v1410
    %v1412 = vlaneseq
    %v1413 = vshrl.u32 %v1412, 7
    %v1414 = vsub.s32 %v1411, %v1413
    %v1415 = vrot.slane %v1401, %v1414
    %v1416 = vcombine.low %v1392, %v1408
    %v1417 = vcombine.high %v1392, %v1408
    %v1419 = vunpack.c.l.s4 1934713408
    %v1420 = vunpack.c.0.s8 %v1419
    %v1421 = vlaneseq
    %v1422 = vshrl.u32 %v1421, 7
    %v1423 = vsub.s32 %v1420, %v1422
    %v1424 = vrot.slane %v1416, %v1423
    %v1426 = vunpack.c.l.s4 1934713408
    %v1427 = vunpack.c.0.s8 %v1426
    %v1428 = vlaneseq
    %v1429 = vshrl.u32 %v1428, 7
    %v1430 = vsub.s32 %v1427, %v1429
    %v1431 = vrot.slane %v1417, %v1430
    %v1432 = vcombine.low %v1399, %v1415
    %v1433 = vcombine.high %v1399, %v1415
    %v1435 = vunpack.c.l.s4 1934713408
    %v1436 = vunpack.c.0.s8 %v1435
    %v1437 = vlaneseq
    %v1438 = vshrl.u32 %v1437, 7
    %v1439 = vsub.s32 %v1436, %v1438
    %v1440 = vrot.slane %v1432, %v1439
    %v1442 = vunpack.c.l.s4 1934713408
    %v1443 = vunpack.c.0.s8 %v1442
    %v1444 = vlaneseq
    %v1445 = vshrl.u32 %v1444, 7
    %v1446 = vsub.s32 %v1443, %v1445
    %v1447 = vrot.slane %v1433, %v1446
    %v1448 = vcombine.high %v1424, 0.0
    %v1449 = vcombine.high %v1431, 0.0
    %v1450 = vcombine.high %v1440, 0.0
    %v1451 = vcombine.high %v1447, 0.0
    %v1452 = vcombine.low %v1424, %v1431
    %v1454 = vunpack.c.l.s4 1983009808
    %v1455 = vunpack.c.0.s8 %v1454
    %v1456 = vlaneseq
    %v1457 = vshrl.u32 %v1456, 7
    %v1458 = vsub.s32 %v1455, %v1457
    %v1459 = vrot.slane %v1452, %v1458
    %v1460 = vcombine.low %v1448, %v1449
    %v1462 = vunpack.c.l.s4 1983009808
    %v1463 = vunpack.c.0.s8 %v1462
    %v1464 = vlaneseq
    %v1465 = vshrl.u32 %v1464, 7
    %v1466 = vsub.s32 %v1463, %v1465
    %v1467 = vrot.slane %v1460, %v1466
    %v1468 = vcombine.low %v1440, %v1447
    %v1470 = vunpack.c.l.s4 1983009808
    %v1471 = vunpack.c.0.s8 %v1470
    %v1472 = vlaneseq
    %v1473 = vshrl.u32 %v1472, 7
    %v1474 = vsub.s32 %v1471, %v1473
    %v1475 = vrot.slane %v1468, %v1474
    %v1476 = vcombine.low %v1450, %v1451
    %v1478 = vunpack.c.l.s4 1983009808
    %v1479 = vunpack.c.0.s8 %v1478
    %v1480 = vlaneseq
    %v1481 = vshrl.u32 %v1480, 7
    %v1482 = vsub.s32 %v1479, %v1481
    %v1483 = vrot.slane %v1476, %v1482
    %v1484 = vcombine.low %v1459, %v1467
    %v1485 = vcombine.high %v1459, %v1467
    %v1487 = vunpack.c.l.s4 1934713408
    %v1488 = vunpack.c.0.s8 %v1487
    %v1489 = vlaneseq
    %v1490 = vshrl.u32 %v1489, 7
    %v1491 = vsub.s32 %v1488, %v1490
    %v1492 = vrot.slane %v1484, %v1491
    %v1494 = vunpack.c.l.s4 1934713408
    %v1495 = vunpack.c.0.s8 %v1494
    %v1496 = vlaneseq
    %v1497 = vshrl.u32 %v1496, 7
    %v1498 = vsub.s32 %v1495, %v1497
    %v1499 = vrot.slane %v1485, %v1498
    %v1500 = vcombine.low %v1475, %v1483
    %v1501 = vcombine.high %v1475, %v1483
    %v1503 = vunpack.c.l.s4 1934713408
    %v1504 = vunpack.c.0.s8 %v1503
    %v1505 = vlaneseq
    %v1506 = vshrl.u32 %v1505, 7
    %v1507 = vsub.s32 %v1504, %v1506
    %v1508 = vrot.slane %v1500, %v1507
    %v1510 = vunpack.c.l.s4 1934713408
    %v1511 = vunpack.c.0.s8 %v1510
    %v1512 = vlaneseq
    %v1513 = vshrl.u32 %v1512, 7
    %v1514 = vsub.s32 %v1511, %v1513
    %v1515 = vrot.slane %v1501, %v1514
    %v1516 = vcombine.low %v1492, %v1508
    %v1517 = vcombine.high %v1492, %v1508
    %v1518 = vcombine.low %v1499, %v1515
    %v1519 = vcombine.high %v1499, %v1515
    %v1520 = vpack.c.bf16 %v1516, %v1516
    %v1521 = vpack.c.bf16 %v1517, %v1517
    %v1522 = vpack.c.bf16 %v1518, %v1518
    %v1523 = vpack.c.bf16 %v1519, %v1519
    %1525 = vrot.lane.b32.xlu0 %v229, 120
    %v1526 = vpop.permute.xlu0 %1525
    %1528 = vrot.lane.b32.xlu0 %v229, 112
    %v1529 = vpop.permute.xlu0 %1528
    %1531 = vrot.lane.b32.xlu0 %v229, 104
    %v1532 = vpop.permute.xlu0 %1531
    %v1534 = vcombine.low %v229, %v1529
    %v1535 = vcombine.high %v229, %v1529
    %v1537 = vunpack.c.l.s4 1983009808
    %v1538 = vunpack.c.0.s8 %v1537
    %v1539 = vlaneseq
    %v1540 = vshrl.u32 %v1539, 7
    %v1541 = vsub.s32 %v1538, %v1540
    %v1542 = vrot.slane %v1534, %v1541
    %v1544 = vunpack.c.l.s4 1983009808
    %v1545 = vunpack.c.0.s8 %v1544
    %v1546 = vlaneseq
    %v1547 = vshrl.u32 %v1546, 7
    %v1548 = vsub.s32 %v1545, %v1547
    %v1549 = vrot.slane %v1535, %v1548
    %v1550 = vcombine.low %v1526, %v1532
    %v1551 = vcombine.high %v1526, %v1532
    %v1553 = vunpack.c.l.s4 1983009808
    %v1554 = vunpack.c.0.s8 %v1553
    %v1555 = vlaneseq
    %v1556 = vshrl.u32 %v1555, 7
    %v1557 = vsub.s32 %v1554, %v1556
    %v1558 = vrot.slane %v1550, %v1557
    %v1560 = vunpack.c.l.s4 1983009808
    %v1561 = vunpack.c.0.s8 %v1560
    %v1562 = vlaneseq
    %v1563 = vshrl.u32 %v1562, 7
    %v1564 = vsub.s32 %v1561, %v1563
    %v1565 = vrot.slane %v1551, %v1564
    %v1566 = vcombine.low %v1542, %v1558
    %v1567 = vcombine.high %v1542, %v1558
    %v1569 = vunpack.c.l.s4 1934713408
    %v1570 = vunpack.c.0.s8 %v1569
    %v1571 = vlaneseq
    %v1572 = vshrl.u32 %v1571, 7
    %v1573 = vsub.s32 %v1570, %v1572
    %v1574 = vrot.slane %v1566, %v1573
    %v1576 = vunpack.c.l.s4 1934713408
    %v1577 = vunpack.c.0.s8 %v1576
    %v1578 = vlaneseq
    %v1579 = vshrl.u32 %v1578, 7
    %v1580 = vsub.s32 %v1577, %v1579
    %v1581 = vrot.slane %v1567, %v1580
    %v1582 = vcombine.low %v1549, %v1565
    %v1583 = vcombine.high %v1549, %v1565
    %v1585 = vunpack.c.l.s4 1934713408
    %v1586 = vunpack.c.0.s8 %v1585
    %v1587 = vlaneseq
    %v1588 = vshrl.u32 %v1587, 7
    %v1589 = vsub.s32 %v1586, %v1588
    %v1590 = vrot.slane %v1582, %v1589
    %v1592 = vunpack.c.l.s4 1934713408
    %v1593 = vunpack.c.0.s8 %v1592
    %v1594 = vlaneseq
    %v1595 = vshrl.u32 %v1594, 7
    %v1596 = vsub.s32 %v1593, %v1595
    %v1597 = vrot.slane %v1583, %v1596
    %v1598 = vcombine.high %v1574, 0.0
    %v1599 = vcombine.high %v1581, 0.0
    %v1600 = vcombine.high %v1590, 0.0
    %v1601 = vcombine.high %v1597, 0.0
    %v1602 = vcombine.low %v1574, %v1581
    %v1604 = vunpack.c.l.s4 1983009808
    %v1605 = vunpack.c.0.s8 %v1604
    %v1606 = vlaneseq
    %v1607 = vshrl.u32 %v1606, 7
    %v1608 = vsub.s32 %v1605, %v1607
    %v1609 = vrot.slane %v1602, %v1608
    %v1610 = vcombine.low %v1598, %v1599
    %v1612 = vunpack.c.l.s4 1983009808
    %v1613 = vunpack.c.0.s8 %v1612
    %v1614 = vlaneseq
    %v1615 = vshrl.u32 %v1614, 7
    %v1616 = vsub.s32 %v1613, %v1615
    %v1617 = vrot.slane %v1610, %v1616
    %v1618 = vcombine.low %v1590, %v1597
    %v1620 = vunpack.c.l.s4 1983009808
    %v1621 = vunpack.c.0.s8 %v1620
    %v1622 = vlaneseq
    %v1623 = vshrl.u32 %v1622, 7
    %v1624 = vsub.s32 %v1621, %v1623
    %v1625 = vrot.slane %v1618, %v1624
    %v1626 = vcombine.low %v1600, %v1601
    %v1628 = vunpack.c.l.s4 1983009808
    %v1629 = vunpack.c.0.s8 %v1628
    %v1630 = vlaneseq
    %v1631 = vshrl.u32 %v1630, 7
    %v1632 = vsub.s32 %v1629, %v1631
    %v1633 = vrot.slane %v1626, %v1632
    %v1634 = vcombine.low %v1609, %v1617
    %v1635 = vcombine.high %v1609, %v1617
    %v1637 = vunpack.c.l.s4 1934713408
    %v1638 = vunpack.c.0.s8 %v1637
    %v1639 = vlaneseq
    %v1640 = vshrl.u32 %v1639, 7
    %v1641 = vsub.s32 %v1638, %v1640
    %v1642 = vrot.slane %v1634, %v1641
    %v1644 = vunpack.c.l.s4 1934713408
    %v1645 = vunpack.c.0.s8 %v1644
    %v1646 = vlaneseq
    %v1647 = vshrl.u32 %v1646, 7
    %v1648 = vsub.s32 %v1645, %v1647
    %v1649 = vrot.slane %v1635, %v1648
    %v1650 = vcombine.low %v1625, %v1633
    %v1651 = vcombine.high %v1625, %v1633
    %v1653 = vunpack.c.l.s4 1934713408
    %v1654 = vunpack.c.0.s8 %v1653
    %v1655 = vlaneseq
    %v1656 = vshrl.u32 %v1655, 7
    %v1657 = vsub.s32 %v1654, %v1656
    %v1658 = vrot.slane %v1650, %v1657
    %v1660 = vunpack.c.l.s4 1934713408
    %v1661 = vunpack.c.0.s8 %v1660
    %v1662 = vlaneseq
    %v1663 = vshrl.u32 %v1662, 7
    %v1664 = vsub.s32 %v1661, %v1663
    %v1665 = vrot.slane %v1651, %v1664
    %v1666 = vcombine.low %v1642, %v1658
    %v1667 = vcombine.high %v1642, %v1658
    %v1668 = vcombine.low %v1649, %v1665
    %v1669 = vcombine.high %v1649, %v1665
    %v1670 = vpack.c.bf16 %v1666, %v1666
    %v1671 = vpack.c.bf16 %v1667, %v1667
    %v1672 = vpack.c.bf16 %v1668, %v1668
    %v1673 = vpack.c.bf16 %v1669, %v1669
    %1675 = vrot.lane.b32.xlu0 %v293, 120
    %v1676 = vpop.permute.xlu0 %1675
    %1678 = vrot.lane.b32.xlu0 %v293, 112
    %v1679 = vpop.permute.xlu0 %1678
    %1681 = vrot.lane.b32.xlu0 %v293, 104
    %v1682 = vpop.permute.xlu0 %1681
    %v1684 = vcombine.low %v293, %v1679
    %v1685 = vcombine.high %v293, %v1679
    %v1687 = vunpack.c.l.s4 1983009808
    %v1688 = vunpack.c.0.s8 %v1687
    %v1689 = vlaneseq
    %v1690 = vshrl.u32 %v1689, 7
    %v1691 = vsub.s32 %v1688, %v1690
    %v1692 = vrot.slane %v1684, %v1691
    %v1694 = vunpack.c.l.s4 1983009808
    %v1695 = vunpack.c.0.s8 %v1694
    %v1696 = vlaneseq
    %v1697 = vshrl.u32 %v1696, 7
    %v1698 = vsub.s32 %v1695, %v1697
    %v1699 = vrot.slane %v1685, %v1698
    %v1700 = vcombine.low %v1676, %v1682
    %v1701 = vcombine.high %v1676, %v1682
    %v1703 = vunpack.c.l.s4 1983009808
    %v1704 = vunpack.c.0.s8 %v1703
    %v1705 = vlaneseq
    %v1706 = vshrl.u32 %v1705, 7
    %v1707 = vsub.s32 %v1704, %v1706
    %v1708 = vrot.slane %v1700, %v1707
    %v1710 = vunpack.c.l.s4 1983009808
    %v1711 = vunpack.c.0.s8 %v1710
    %v1712 = vlaneseq
    %v1713 = vshrl.u32 %v1712, 7
    %v1714 = vsub.s32 %v1711, %v1713
    %v1715 = vrot.slane %v1701, %v1714
    %v1716 = vcombine.low %v1692, %v1708
    %v1717 = vcombine.high %v1692, %v1708
    %v1719 = vunpack.c.l.s4 1934713408
    %v1720 = vunpack.c.0.s8 %v1719
    %v1721 = vlaneseq
    %v1722 = vshrl.u32 %v1721, 7
    %v1723 = vsub.s32 %v1720, %v1722
    %v1724 = vrot.slane %v1716, %v1723
    %v1726 = vunpack.c.l.s4 1934713408
    %v1727 = vunpack.c.0.s8 %v1726
    %v1728 = vlaneseq
    %v1729 = vshrl.u32 %v1728, 7
    %v1730 = vsub.s32 %v1727, %v1729
    %v1731 = vrot.slane %v1717, %v1730
    %v1732 = vcombine.low %v1699, %v1715
    %v1733 = vcombine.high %v1699, %v1715
    %v1735 = vunpack.c.l.s4 1934713408
    %v1736 = vunpack.c.0.s8 %v1735
    %v1737 = vlaneseq
    %v1738 = vshrl.u32 %v1737, 7
    %v1739 = vsub.s32 %v1736, %v1738
    %v1740 = vrot.slane %v1732, %v1739
    %v1742 = vunpack.c.l.s4 1934713408
    %v1743 = vunpack.c.0.s8 %v1742
    %v1744 = vlaneseq
    %v1745 = vshrl.u32 %v1744, 7
    %v1746 = vsub.s32 %v1743, %v1745
    %v1747 = vrot.slane %v1733, %v1746
    %v1748 = vcombine.high %v1724, 0.0
    %v1749 = vcombine.high %v1731, 0.0
    %v1750 = vcombine.high %v1740, 0.0
    %v1751 = vcombine.high %v1747, 0.0
    %v1752 = vcombine.low %v1724, %v1731
    %v1754 = vunpack.c.l.s4 1983009808
    %v1755 = vunpack.c.0.s8 %v1754
    %v1756 = vlaneseq
    %v1757 = vshrl.u32 %v1756, 7
    %v1758 = vsub.s32 %v1755, %v1757
    %v1759 = vrot.slane %v1752, %v1758
    %v1760 = vcombine.low %v1748, %v1749
    %v1762 = vunpack.c.l.s4 1983009808
    %v1763 = vunpack.c.0.s8 %v1762
    %v1764 = vlaneseq
    %v1765 = vshrl.u32 %v1764, 7
    %v1766 = vsub.s32 %v1763, %v1765
    %v1767 = vrot.slane %v1760, %v1766
    %v1768 = vcombine.low %v1740, %v1747
    %v1770 = vunpack.c.l.s4 1983009808
    %v1771 = vunpack.c.0.s8 %v1770
    %v1772 = vlaneseq
    %v1773 = vshrl.u32 %v1772, 7
    %v1774 = vsub.s32 %v1771, %v1773
    %v1775 = vrot.slane %v1768, %v1774
    %v1776 = vcombine.low %v1750, %v1751
    %v1778 = vunpack.c.l.s4 1983009808
    %v1779 = vunpack.c.0.s8 %v1778
    %v1780 = vlaneseq
    %v1781 = vshrl.u32 %v1780, 7
    %v1782 = vsub.s32 %v1779, %v1781
    %v1783 = vrot.slane %v1776, %v1782
    %v1784 = vcombine.low %v1759, %v1767
    %v1785 = vcombine.high %v1759, %v1767
    %v1787 = vunpack.c.l.s4 1934713408
    %v1788 = vunpack.c.0.s8 %v1787
    %v1789 = vlaneseq
    %v1790 = vshrl.u32 %v1789, 7
    %v1791 = vsub.s32 %v1788, %v1790
    %v1792 = vrot.slane %v1784, %v1791
    %v1794 = vunpack.c.l.s4 1934713408
    %v1795 = vunpack.c.0.s8 %v1794
    %v1796 = vlaneseq
    %v1797 = vshrl.u32 %v1796, 7
    %v1798 = vsub.s32 %v1795, %v1797
    %v1799 = vrot.slane %v1785, %v1798
    %v1800 = vcombine.low %v1775, %v1783
    %v1801 = vcombine.high %v1775, %v1783
    %v1803 = vunpack.c.l.s4 1934713408
    %v1804 = vunpack.c.0.s8 %v1803
    %v1805 = vlaneseq
    %v1806 = vshrl.u32 %v1805, 7
    %v1807 = vsub.s32 %v1804, %v1806
    %v1808 = vrot.slane %v1800, %v1807
    %v1810 = vunpack.c.l.s4 1934713408
    %v1811 = vunpack.c.0.s8 %v1810
    %v1812 = vlaneseq
    %v1813 = vshrl.u32 %v1812, 7
    %v1814 = vsub.s32 %v1811, %v1813
    %v1815 = vrot.slane %v1801, %v1814
    %v1816 = vcombine.low %v1792, %v1808
    %v1817 = vcombine.high %v1792, %v1808
    %v1818 = vcombine.low %v1799, %v1815
    %v1819 = vcombine.high %v1799, %v1815
    %v1820 = vpack.c.bf16 %v1816, %v1816
    %v1821 = vpack.c.bf16 %v1817, %v1817
    %v1822 = vpack.c.bf16 %v1818, %v1818
    %v1823 = vpack.c.bf16 %v1819, %v1819
    %v1825 = vsel %vm757, %v1520, 0
    %v1828 = vsel %vm757, %v1670, 0
    %1830 = vmatprep.subr.bf16.mxu0 0
    %1831 = vmatpush1.bf16.xpose.msra.mxu0 %v1828
    %1832 = vmatprep.subr.bf16.mxu0 0
    %1833 = vmatpush1.bf16.xpose.msra.mxu0 0
    %1834 = vmatprep.subr.bf16.mxu0 0
    %1835 = vmatpush1.bf16.xpose.msra.mxu0 0
    %1836 = vmatprep.subr.bf16.mxu0 0
    %1837 = vmatpush1.bf16.xpose.msra.mxu0 0
    %1838 = vmatprep.subr.bf16.mxu0 0
    %1839 = vmatpush1.bf16.xpose.msra.mxu0 0
    %1840 = vmatprep.subr.bf16.mxu0 0
    %1841 = vmatpush1.bf16.xpose.msra.mxu0 0
    %1842 = vmatprep.subr.bf16.mxu0 0
    %1843 = vmatpush1.bf16.xpose.msra.mxu0 0
    %1844 = vmatprep.subr.bf16.mxu0 0
    %1845 = vmatpush1.bf16.xpose.msra.mxu0 0
    %1846 = vmatprep.subr.bf16.mxu0 0
    %1847 = vmatpush1.bf16.xpose.msra.mxu0 0
    %1848 = vmatprep.subr.bf16.mxu0 0
    %1849 = vmatpush1.bf16.xpose.msra.mxu0 0
    %1850 = vmatprep.subr.bf16.mxu0 0
    %1851 = vmatpush1.bf16.xpose.msra.mxu0 0
    %1852 = vmatprep.subr.bf16.mxu0 0
    %1853 = vmatpush1.bf16.xpose.msra.mxu0 0
    %1854 = vmatprep.subr.bf16.mxu0 0
    %1855 = vmatpush1.bf16.xpose.msra.mxu0 0
    %1856 = vmatprep.subr.bf16.mxu0 0
    %1857 = vmatpush1.bf16.xpose.msra.mxu0 0
    %1858 = vmatprep.subr.bf16.mxu0 0
    %1859 = vmatpush1.bf16.xpose.msra.mxu0 0
    %1860 = vmatprep.subr.bf16.mxu0 0
    %1861 = vmatpush1.bf16.xpose.msra.mxu0 0
    %1862 = vmatprep.mubr.bf16.mxu0 0
    %1863 = vmatmul.mubr.bf16.gmra.mrb[0].mxu0 %v1825
    %v1864 = vpop.f32.mrb[0].mxu0
    %v1865 = vadd.f32 %v301, %v1864
    %v1866 = vpop.f32.mrb[0].mxu0
    %v1867 = vpop.f32.mrb[0].mxu0
    %v1868 = vpop.f32.mrb[0].mxu0
    %1869 = vdwg.mxu0
    %v1871 = vsel %vm757, %v1521, 0
    %v1874 = vsel %vm757, %v1671, 0
    %1876 = vmatprep.subr.bf16.mxu0 0
    %1877 = vmatpush1.bf16.xpose.msra.mxu0 %v1874
    %1878 = vmatprep.subr.bf16.mxu0 0
    %1879 = vmatpush1.bf16.xpose.msra.mxu0 0
    %1880 = vmatprep.subr.bf16.mxu0 0
    %1881 = vmatpush1.bf16.xpose.msra.mxu0 0
    %1882 = vmatprep.subr.bf16.mxu0 0
    %1883 = vmatpush1.bf16.xpose.msra.mxu0 0
    %1884 = vmatprep.subr.bf16.mxu0 0
    %1885 = vmatpush1.bf16.xpose.msra.mxu0 0
    %1886 = vmatprep.subr.bf16.mxu0 0
    %1887 = vmatpush1.bf16.xpose.msra.mxu0 0
    %1888 = vmatprep.subr.bf16.mxu0 0
    %1889 = vmatpush1.bf16.xpose.msra.mxu0 0
    %1890 = vmatprep.subr.bf16.mxu0 0
    %1891 = vmatpush1.bf16.xpose.msra.mxu0 0
    %1892 = vmatprep.subr.bf16.mxu0 0
    %1893 = vmatpush1.bf16.xpose.msra.mxu0 0
    %1894 = vmatprep.subr.bf16.mxu0 0
    %1895 = vmatpush1.bf16.xpose.msra.mxu0 0
    %1896 = vmatprep.subr.bf16.mxu0 0
    %1897 = vmatpush1.bf16.xpose.msra.mxu0 0
    %1898 = vmatprep.subr.bf16.mxu0 0
    %1899 = vmatpush1.bf16.xpose.msra.mxu0 0
    %1900 = vmatprep.subr.bf16.mxu0 0
    %1901 = vmatpush1.bf16.xpose.msra.mxu0 0
    %1902 = vmatprep.subr.bf16.mxu0 0
    %1903 = vmatpush1.bf16.xpose.msra.mxu0 0
    %1904 = vmatprep.subr.bf16.mxu0 0
    %1905 = vmatpush1.bf16.xpose.msra.mxu0 0
    %1906 = vmatprep.subr.bf16.mxu0 0
    %1907 = vmatpush1.bf16.xpose.msra.mxu0 0
    %1908 = vmatprep.mubr.bf16.mxu0 0
    %1909 = vmatmul.mubr.bf16.gmra.mrb[0].mxu0 %v1871
    %v1910 = vpop.f32.mrb[0].mxu0
    %v1911 = vadd.f32 %v301, %v1910
    %v1912 = vpop.f32.mrb[0].mxu0
    %v1913 = vpop.f32.mrb[0].mxu0
    %v1914 = vpop.f32.mrb[0].mxu0
    %1915 = vdwg.mxu0
    %v1917 = vsel %vm757, %v1522, 0
    %v1920 = vsel %vm757, %v1672, 0
    %1922 = vmatprep.subr.bf16.mxu0 0
    %1923 = vmatpush1.bf16.xpose.msra.mxu0 %v1920
    %1924 = vmatprep.subr.bf16.mxu0 0
    %1925 = vmatpush1.bf16.xpose.msra.mxu0 0
    %1926 = vmatprep.subr.bf16.mxu0 0
    %1927 = vmatpush1.bf16.xpose.msra.mxu0 0
    %1928 = vmatprep.subr.bf16.mxu0 0
    %1929 = vmatpush1.bf16.xpose.msra.mxu0 0
    %1930 = vmatprep.subr.bf16.mxu0 0
    %1931 = vmatpush1.bf16.xpose.msra.mxu0 0
    %1932 = vmatprep.subr.bf16.mxu0 0
    %1933 = vmatpush1.bf16.xpose.msra.mxu0 0
    %1934 = vmatprep.subr.bf16.mxu0 0
    %1935 = vmatpush1.bf16.xpose.msra.mxu0 0
    %1936 = vmatprep.subr.bf16.mxu0 0
    %1937 = vmatpush1.bf16.xpose.msra.mxu0 0
    %1938 = vmatprep.subr.bf16.mxu0 0
    %1939 = vmatpush1.bf16.xpose.msra.mxu0 0
    %1940 = vmatprep.subr.bf16.mxu0 0
    %1941 = vmatpush1.bf16.xpose.msra.mxu0 0
    %1942 = vmatprep.subr.bf16.mxu0 0
    %1943 = vmatpush1.bf16.xpose.msra.mxu0 0
    %1944 = vmatprep.subr.bf16.mxu0 0
    %1945 = vmatpush1.bf16.xpose.msra.mxu0 0
    %1946 = vmatprep.subr.bf16.mxu0 0
    %1947 = vmatpush1.bf16.xpose.msra.mxu0 0
    %1948 = vmatprep.subr.bf16.mxu0 0
    %1949 = vmatpush1.bf16.xpose.msra.mxu0 0
    %1950 = vmatprep.subr.bf16.mxu0 0
    %1951 = vmatpush1.bf16.xpose.msra.mxu0 0
    %1952 = vmatprep.subr.bf16.mxu0 0
    %1953 = vmatpush1.bf16.xpose.msra.mxu0 0
    %1954 = vmatprep.mubr.bf16.mxu0 0
    %1955 = vmatmul.mubr.bf16.gmra.mrb[0].mxu0 %v1917
    %v1956 = vpop.f32.mrb[0].mxu0
    %v1957 = vadd.f32 %v301, %v1956
    %v1958 = vpop.f32.mrb[0].mxu0
    %v1959 = vpop.f32.mrb[0].mxu0
    %v1960 = vpop.f32.mrb[0].mxu0
    %1961 = vdwg.mxu0
    %v1963 = vsel %vm757, %v1523, 0
    %v1966 = vsel %vm757, %v1673, 0
    %1968 = vmatprep.subr.bf16.mxu0 0
    %1969 = vmatpush1.bf16.xpose.msra.mxu0 %v1966
    %1970 = vmatprep.subr.bf16.mxu0 0
    %1971 = vmatpush1.bf16.xpose.msra.mxu0 0
    %1972 = vmatprep.subr.bf16.mxu0 0
    %1973 = vmatpush1.bf16.xpose.msra.mxu0 0
    %1974 = vmatprep.subr.bf16.mxu0 0
    %1975 = vmatpush1.bf16.xpose.msra.mxu0 0
    %1976 = vmatprep.subr.bf16.mxu0 0
    %1977 = vmatpush1.bf16.xpose.msra.mxu0 0
    %1978 = vmatprep.subr.bf16.mxu0 0
    %1979 = vmatpush1.bf16.xpose.msra.mxu0 0
    %1980 = vmatprep.subr.bf16.mxu0 0
    %1981 = vmatpush1.bf16.xpose.msra.mxu0 0
    %1982 = vmatprep.subr.bf16.mxu0 0
    %1983 = vmatpush1.bf16.xpose.msra.mxu0 0
    %1984 = vmatprep.subr.bf16.mxu0 0
    %1985 = vmatpush1.bf16.xpose.msra.mxu0 0
    %1986 = vmatprep.subr.bf16.mxu0 0
    %1987 = vmatpush1.bf16.xpose.msra.mxu0 0
    %1988 = vmatprep.subr.bf16.mxu0 0
    %1989 = vmatpush1.bf16.xpose.msra.mxu0 0
    %1990 = vmatprep.subr.bf16.mxu0 0
    %1991 = vmatpush1.bf16.xpose.msra.mxu0 0
    %1992 = vmatprep.subr.bf16.mxu0 0
    %1993 = vmatpush1.bf16.xpose.msra.mxu0 0
    %1994 = vmatprep.subr.bf16.mxu0 0
    %1995 = vmatpush1.bf16.xpose.msra.mxu0 0
    %1996 = vmatprep.subr.bf16.mxu0 0
    %1997 = vmatpush1.bf16.xpose.msra.mxu0 0
    %1998 = vmatprep.subr.bf16.mxu0 0
    %1999 = vmatpush1.bf16.xpose.msra.mxu0 0
    %2000 = vmatprep.mubr.bf16.mxu0 0
    %2001 = vmatmul.mubr.bf16.gmra.mrb[0].mxu0 %v1963
    %v2002 = vpop.f32.mrb[0].mxu0
    %v2003 = vadd.f32 %v301, %v2002
    %v2004 = vpop.f32.mrb[0].mxu0
    %v2005 = vpop.f32.mrb[0].mxu0
    %v2006 = vpop.f32.mrb[0].mxu0
    %2007 = vdwg.mxu0
    %v2008 = vsel %vm757, %v1865, -inf
    %2009 = vmax.xlane.f32.xlu0 %v2008
    %v2010 = vpop.xlane.xlu0 %2009
    %v2011 = vsel %vm757, %v1911, -inf
    %2012 = vmax.xlane.f32.xlu0 %v2011
    %v2013 = vpop.xlane.xlu0 %2012
    %v2014 = vsel %vm757, %v1957, -inf
    %2015 = vmax.xlane.f32.xlu0 %v2014
    %v2016 = vpop.xlane.xlu0 %2015
    %v2017 = vsel %vm757, %v2003, -inf
    %2018 = vmax.xlane.f32.xlu0 %v2017
    %v2019 = vpop.xlane.xlu0 %2018
    %v2020 = vsub.f32 %v1865, %v2010
    %v2021 = vsub.f32 %v1911, %v2013
    %v2022 = vsub.f32 %v1957, %v2016
    %v2023 = vsub.f32 %v2003, %v2019
    %v2024 = vmul.f32 %v2020, 1.442695
    %v2025 = vpow.pop %v2024
    %v2026 = vmul.f32 %v2021, 1.442695
    %v2027 = vpow.pop %v2026
    %v2028 = vmul.f32 %v2022, 1.442695
    %v2029 = vpow.pop %v2028
    %v2030 = vmul.f32 %v2023, 1.442695
    %v2031 = vpow.pop %v2030
    %v2032 = vsel %vm757, %v2025, 0.0
    %2033 = vadd.xlane.f32.xlu0 %v2032
    %v2034 = vpop.xlane.xlu0 %2033
    %v2035 = vsel %vm757, %v2027, 0.0
    %2036 = vadd.xlane.f32.xlu0 %v2035
    %v2037 = vpop.xlane.xlu0 %2036
    %v2038 = vsel %vm757, %v2029, 0.0
    %2039 = vadd.xlane.f32.xlu0 %v2038
    %v2040 = vpop.xlane.xlu0 %2039
    %v2041 = vsel %vm757, %v2031, 0.0
    %2042 = vadd.xlane.f32.xlu0 %v2041
    %v2043 = vpop.xlane.xlu0 %2042
    %v2044 = vpack.c.bf16 %v2025, %v2025
    %v2045 = vpack.c.bf16 %v2027, %v2027
    %v2046 = vpack.c.bf16 %v2029, %v2029
    %v2047 = vpack.c.bf16 %v2031, %v2031
    %v2049 = vsel %vm757, %v2044, 0
    %v2052 = vsel %vm985, %v1820, 0
    %2054 = vmatprep.subr.bf16.mxu0 0
    %2055 = vmatpush1.bf16.msra.mxu0 %v2052
    %2056 = vmatprep.subr.bf16.mxu0 0
    %2057 = vmatpush1.bf16.msra.mxu0 0
    %2058 = vmatprep.subr.bf16.mxu0 0
    %2059 = vmatpush1.bf16.msra.mxu0 0
    %2060 = vmatprep.subr.bf16.mxu0 0
    %2061 = vmatpush1.bf16.msra.mxu0 0
    %2062 = vmatprep.subr.bf16.mxu0 0
    %2063 = vmatpush1.bf16.msra.mxu0 0
    %2064 = vmatprep.subr.bf16.mxu0 0
    %2065 = vmatpush1.bf16.msra.mxu0 0
    %2066 = vmatprep.subr.bf16.mxu0 0
    %2067 = vmatpush1.bf16.msra.mxu0 0
    %2068 = vmatprep.subr.bf16.mxu0 0
    %2069 = vmatpush1.bf16.msra.mxu0 0
    %2070 = vmatprep.subr.bf16.mxu0 0
    %2071 = vmatpush1.bf16.msra.mxu0 0
    %2072 = vmatprep.subr.bf16.mxu0 0
    %2073 = vmatpush1.bf16.msra.mxu0 0
    %2074 = vmatprep.subr.bf16.mxu0 0
    %2075 = vmatpush1.bf16.msra.mxu0 0
    %2076 = vmatprep.subr.bf16.mxu0 0
    %2077 = vmatpush1.bf16.msra.mxu0 0
    %2078 = vmatprep.subr.bf16.mxu0 0
    %2079 = vmatpush1.bf16.msra.mxu0 0
    %2080 = vmatprep.subr.bf16.mxu0 0
    %2081 = vmatpush1.bf16.msra.mxu0 0
    %2082 = vmatprep.subr.bf16.mxu0 0
    %2083 = vmatpush1.bf16.msra.mxu0 0
    %2084 = vmatprep.subr.bf16.mxu0 0
    %2085 = vmatpush1.bf16.msra.mxu0 0
    %2086 = vmatprep.mubr.bf16.mxu0 0
    %2087 = vmatmul.mubr.bf16.gmra.mrb[0].mxu0 %v2049
    %v2088 = vpop.f32.mrb[0].mxu0
    %v2089 = vadd.f32 0.0, %v2088
    %v2090 = vpop.f32.mrb[0].mxu0
    %v2091 = vpop.f32.mrb[0].mxu0
    %v2092 = vpop.f32.mrb[0].mxu0
    %2093 = vdwg.mxu0
    %v2095 = vsel %vm757, %v2045, 0
    %v2098 = vsel %vm985, %v1821, 0
    %2100 = vmatprep.subr.bf16.mxu0 0
    %2101 = vmatpush1.bf16.msra.mxu0 %v2098
    %2102 = vmatprep.subr.bf16.mxu0 0
    %2103 = vmatpush1.bf16.msra.mxu0 0
    %2104 = vmatprep.subr.bf16.mxu0 0
    %2105 = vmatpush1.bf16.msra.mxu0 0
    %2106 = vmatprep.subr.bf16.mxu0 0
    %2107 = vmatpush1.bf16.msra.mxu0 0
    %2108 = vmatprep.subr.bf16.mxu0 0
    %2109 = vmatpush1.bf16.msra.mxu0 0
    %2110 = vmatprep.subr.bf16.mxu0 0
    %2111 = vmatpush1.bf16.msra.mxu0 0
    %2112 = vmatprep.subr.bf16.mxu0 0
    %2113 = vmatpush1.bf16.msra.mxu0 0
    %2114 = vmatprep.subr.bf16.mxu0 0
    %2115 = vmatpush1.bf16.msra.mxu0 0
    %2116 = vmatprep.subr.bf16.mxu0 0
    %2117 = vmatpush1.bf16.msra.mxu0 0
    %2118 = vmatprep.subr.bf16.mxu0 0
    %2119 = vmatpush1.bf16.msra.mxu0 0
    %2120 = vmatprep.subr.bf16.mxu0 0
    %2121 = vmatpush1.bf16.msra.mxu0 0
    %2122 = vmatprep.subr.bf16.mxu0 0
    %2123 = vmatpush1.bf16.msra.mxu0 0
    %2124 = vmatprep.subr.bf16.mxu0 0
    %2125 = vmatpush1.bf16.msra.mxu0 0
    %2126 = vmatprep.subr.bf16.mxu0 0
    %2127 = vmatpush1.bf16.msra.mxu0 0
    %2128 = vmatprep.subr.bf16.mxu0 0
    %2129 = vmatpush1.bf16.msra.mxu0 0
    %2130 = vmatprep.subr.bf16.mxu0 0
    %2131 = vmatpush1.bf16.msra.mxu0 0
    %2132 = vmatprep.mubr.bf16.mxu0 0
    %2133 = vmatmul.mubr.bf16.gmra.mrb[0].mxu0 %v2095
    %v2134 = vpop.f32.mrb[0].mxu0
    %v2135 = vadd.f32 0.0, %v2134
    %v2136 = vpop.f32.mrb[0].mxu0
    %v2137 = vpop.f32.mrb[0].mxu0
    %v2138 = vpop.f32.mrb[0].mxu0
    %2139 = vdwg.mxu0
    %v2141 = vsel %vm757, %v2046, 0
    %v2144 = vsel %vm985, %v1822, 0
    %2146 = vmatprep.subr.bf16.mxu0 0
    %2147 = vmatpush1.bf16.msra.mxu0 %v2144
    %2148 = vmatprep.subr.bf16.mxu0 0
    %2149 = vmatpush1.bf16.msra.mxu0 0
    %2150 = vmatprep.subr.bf16.mxu0 0
    %2151 = vmatpush1.bf16.msra.mxu0 0
    %2152 = vmatprep.subr.bf16.mxu0 0
    %2153 = vmatpush1.bf16.msra.mxu0 0
    %2154 = vmatprep.subr.bf16.mxu0 0
    %2155 = vmatpush1.bf16.msra.mxu0 0
    %2156 = vmatprep.subr.bf16.mxu0 0
    %2157 = vmatpush1.bf16.msra.mxu0 0
    %2158 = vmatprep.subr.bf16.mxu0 0
    %2159 = vmatpush1.bf16.msra.mxu0 0
    %2160 = vmatprep.subr.bf16.mxu0 0
    %2161 = vmatpush1.bf16.msra.mxu0 0
    %2162 = vmatprep.subr.bf16.mxu0 0
    %2163 = vmatpush1.bf16.msra.mxu0 0
    %2164 = vmatprep.subr.bf16.mxu0 0
    %2165 = vmatpush1.bf16.msra.mxu0 0
    %2166 = vmatprep.subr.bf16.mxu0 0
    %2167 = vmatpush1.bf16.msra.mxu0 0
    %2168 = vmatprep.subr.bf16.mxu0 0
    %2169 = vmatpush1.bf16.msra.mxu0 0
    %2170 = vmatprep.subr.bf16.mxu0 0
    %2171 = vmatpush1.bf16.msra.mxu0 0
    %2172 = vmatprep.subr.bf16.mxu0 0
    %2173 = vmatpush1.bf16.msra.mxu0 0
    %2174 = vmatprep.subr.bf16.mxu0 0
    %2175 = vmatpush1.bf16.msra.mxu0 0
    %2176 = vmatprep.subr.bf16.mxu0 0
    %2177 = vmatpush1.bf16.msra.mxu0 0
    %2178 = vmatprep.mubr.bf16.mxu0 0
    %2179 = vmatmul.mubr.bf16.gmra.mrb[0].mxu0 %v2141
    %v2180 = vpop.f32.mrb[0].mxu0
    %v2181 = vadd.f32 0.0, %v2180
    %v2182 = vpop.f32.mrb[0].mxu0
    %v2183 = vpop.f32.mrb[0].mxu0
    %v2184 = vpop.f32.mrb[0].mxu0
    %2185 = vdwg.mxu0
    %v2187 = vsel %vm757, %v2047, 0
    %v2190 = vsel %vm985, %v1823, 0
    %2192 = vmatprep.subr.bf16.mxu0 0
    %2193 = vmatpush1.bf16.msra.mxu0 %v2190
    %2194 = vmatprep.subr.bf16.mxu0 0
    %2195 = vmatpush1.bf16.msra.mxu0 0
    %2196 = vmatprep.subr.bf16.mxu0 0
    %2197 = vmatpush1.bf16.msra.mxu0 0
    %2198 = vmatprep.subr.bf16.mxu0 0
    %2199 = vmatpush1.bf16.msra.mxu0 0
    %2200 = vmatprep.subr.bf16.mxu0 0
    %2201 = vmatpush1.bf16.msra.mxu0 0
    %2202 = vmatprep.subr.bf16.mxu0 0
    %2203 = vmatpush1.bf16.msra.mxu0 0
    %2204 = vmatprep.subr.bf16.mxu0 0
    %2205 = vmatpush1.bf16.msra.mxu0 0
    %2206 = vmatprep.subr.bf16.mxu0 0
    %2207 = vmatpush1.bf16.msra.mxu0 0
    %2208 = vmatprep.subr.bf16.mxu0 0
    %2209 = vmatpush1.bf16.msra.mxu0 0
    %2210 = vmatprep.subr.bf16.mxu0 0
    %2211 = vmatpush1.bf16.msra.mxu0 0
    %2212 = vmatprep.subr.bf16.mxu0 0
    %2213 = vmatpush1.bf16.msra.mxu0 0
    %2214 = vmatprep.subr.bf16.mxu0 0
    %2215 = vmatpush1.bf16.msra.mxu0 0
    %2216 = vmatprep.subr.bf16.mxu0 0
    %2217 = vmatpush1.bf16.msra.mxu0 0
    %2218 = vmatprep.subr.bf16.mxu0 0
    %2219 = vmatpush1.bf16.msra.mxu0 0
    %2220 = vmatprep.subr.bf16.mxu0 0
    %2221 = vmatpush1.bf16.msra.mxu0 0
    %2222 = vmatprep.subr.bf16.mxu0 0
    %2223 = vmatpush1.bf16.msra.mxu0 0
    %2224 = vmatprep.mubr.bf16.mxu0 0
    %2225 = vmatmul.mubr.bf16.gmra.mrb[0].mxu0 %v2187
    %v2226 = vpop.f32.mrb[0].mxu0
    %v2227 = vadd.f32 0.0, %v2226
    %v2228 = vpop.f32.mrb[0].mxu0
    %v2229 = vpop.f32.mrb[0].mxu0
    %v2230 = vpop.f32.mrb[0].mxu0
    %2231 = vdwg.mxu0
    %v2232 = vrcp.pop %v2034
    %v2233 = vmul.f32 %v2089, %v2232
    %v2234 = vrcp.pop %v2037
    %v2235 = vmul.f32 %v2135, %v2234
    %v2236 = vrcp.pop %v2040
    %v2237 = vmul.f32 %v2181, %v2236
    %v2238 = vrcp.pop %v2043
    %v2239 = vmul.f32 %v2227, %v2238
    %v2240 = vpack.c.bf16 %v2233, %v2233
    %v2241 = vpack.c.bf16 %v2235, %v2235
    %v2242 = vpack.c.bf16 %v2237, %v2237
    %v2243 = vpack.c.bf16 %v2239, %v2239
    %v2245 = vsel %vm757, %v2240, 0
    %2247 = vmatprep.subr.bf16.mxu0 0
    %2248 = vmatpush1.bf16.msra.mxu0 %v1183
    %2249 = vmatprep.subr.bf16.mxu0 0
    %2250 = vmatpush1.bf16.msra.mxu0 0
    %2251 = vmatprep.subr.bf16.mxu0 0
    %2252 = vmatpush1.bf16.msra.mxu0 0
    %2253 = vmatprep.subr.bf16.mxu0 0
    %2254 = vmatpush1.bf16.msra.mxu0 0
    %2255 = vmatprep.subr.bf16.mxu0 0
    %2256 = vmatpush1.bf16.msra.mxu0 0
    %2257 = vmatprep.subr.bf16.mxu0 0
    %2258 = vmatpush1.bf16.msra.mxu0 0
    %2259 = vmatprep.subr.bf16.mxu0 0
    %2260 = vmatpush1.bf16.msra.mxu0 0
    %2261 = vmatprep.subr.bf16.mxu0 0
    %2262 = vmatpush1.bf16.msra.mxu0 0
    %2263 = vmatprep.subr.bf16.mxu0 0
    %2264 = vmatpush1.bf16.msra.mxu0 0
    %2265 = vmatprep.subr.bf16.mxu0 0
    %2266 = vmatpush1.bf16.msra.mxu0 0
    %2267 = vmatprep.subr.bf16.mxu0 0
    %2268 = vmatpush1.bf16.msra.mxu0 0
    %2269 = vmatprep.subr.bf16.mxu0 0
    %2270 = vmatpush1.bf16.msra.mxu0 0
    %2271 = vmatprep.subr.bf16.mxu0 0
    %2272 = vmatpush1.bf16.msra.mxu0 0
    %2273 = vmatprep.subr.bf16.mxu0 0
    %2274 = vmatpush1.bf16.msra.mxu0 0
    %2275 = vmatprep.subr.bf16.mxu0 0
    %2276 = vmatpush1.bf16.msra.mxu0 0
    %2277 = vmatprep.subr.bf16.mxu0 0
    %2278 = vmatpush1.bf16.msra.mxu0 0
    %2279 = vmatprep.mubr.bf16.mxu0 0
    %2280 = vmatmul.mubr.bf16.gmra.mrb[0].mxu0 %v2245
    %v2281 = vpop.f32.mrb[0].mxu0
    %v2282 = vadd.f32 0.0, %v2281
    %v2283 = vpop.f32.mrb[0].mxu0
    %v2284 = vpop.f32.mrb[0].mxu0
    %v2285 = vpop.f32.mrb[0].mxu0
    %2286 = vdwg.mxu0
    %v2288 = vsel %vm757, %v2241, 0
    %2290 = vmatprep.subr.bf16.mxu0 0
    %2291 = vmatpush1.bf16.msra.mxu0 %v1229
    %2292 = vmatprep.subr.bf16.mxu0 0
    %2293 = vmatpush1.bf16.msra.mxu0 0
    %2294 = vmatprep.subr.bf16.mxu0 0
    %2295 = vmatpush1.bf16.msra.mxu0 0
    %2296 = vmatprep.subr.bf16.mxu0 0
    %2297 = vmatpush1.bf16.msra.mxu0 0
    %2298 = vmatprep.subr.bf16.mxu0 0
    %2299 = vmatpush1.bf16.msra.mxu0 0
    %2300 = vmatprep.subr.bf16.mxu0 0
    %2301 = vmatpush1.bf16.msra.mxu0 0
    %2302 = vmatprep.subr.bf16.mxu0 0
    %2303 = vmatpush1.bf16.msra.mxu0 0
    %2304 = vmatprep.subr.bf16.mxu0 0
    %2305 = vmatpush1.bf16.msra.mxu0 0
    %2306 = vmatprep.subr.bf16.mxu0 0
    %2307 = vmatpush1.bf16.msra.mxu0 0
    %2308 = vmatprep.subr.bf16.mxu0 0
    %2309 = vmatpush1.bf16.msra.mxu0 0
    %2310 = vmatprep.subr.bf16.mxu0 0
    %2311 = vmatpush1.bf16.msra.mxu0 0
    %2312 = vmatprep.subr.bf16.mxu0 0
    %2313 = vmatpush1.bf16.msra.mxu0 0
    %2314 = vmatprep.subr.bf16.mxu0 0
    %2315 = vmatpush1.bf16.msra.mxu0 0
    %2316 = vmatprep.subr.bf16.mxu0 0
    %2317 = vmatpush1.bf16.msra.mxu0 0
    %2318 = vmatprep.subr.bf16.mxu0 0
    %2319 = vmatpush1.bf16.msra.mxu0 0
    %2320 = vmatprep.subr.bf16.mxu0 0
    %2321 = vmatpush1.bf16.msra.mxu0 0
    %2322 = vmatprep.mubr.bf16.mxu0 0
    %2323 = vmatmul.mubr.bf16.gmra.mrb[0].mxu0 %v2288
    %v2324 = vpop.f32.mrb[0].mxu0
    %v2325 = vadd.f32 0.0, %v2324
    %v2326 = vpop.f32.mrb[0].mxu0
    %v2327 = vpop.f32.mrb[0].mxu0
    %v2328 = vpop.f32.mrb[0].mxu0
    %2329 = vdwg.mxu0
    %v2331 = vsel %vm757, %v2242, 0
    %2333 = vmatprep.subr.bf16.mxu0 0
    %2334 = vmatpush1.bf16.msra.mxu0 %v1275
    %2335 = vmatprep.subr.bf16.mxu0 0
    %2336 = vmatpush1.bf16.msra.mxu0 0
    %2337 = vmatprep.subr.bf16.mxu0 0
    %2338 = vmatpush1.bf16.msra.mxu0 0
    %2339 = vmatprep.subr.bf16.mxu0 0
    %2340 = vmatpush1.bf16.msra.mxu0 0
    %2341 = vmatprep.subr.bf16.mxu0 0
    %2342 = vmatpush1.bf16.msra.mxu0 0
    %2343 = vmatprep.subr.bf16.mxu0 0
    %2344 = vmatpush1.bf16.msra.mxu0 0
    %2345 = vmatprep.subr.bf16.mxu0 0
    %2346 = vmatpush1.bf16.msra.mxu0 0
    %2347 = vmatprep.subr.bf16.mxu0 0
    %2348 = vmatpush1.bf16.msra.mxu0 0
    %2349 = vmatprep.subr.bf16.mxu0 0
    %2350 = vmatpush1.bf16.msra.mxu0 0
    %2351 = vmatprep.subr.bf16.mxu0 0
    %2352 = vmatpush1.bf16.msra.mxu0 0
    %2353 = vmatprep.subr.bf16.mxu0 0
    %2354 = vmatpush1.bf16.msra.mxu0 0
    %2355 = vmatprep.subr.bf16.mxu0 0
    %2356 = vmatpush1.bf16.msra.mxu0 0
    %2357 = vmatprep.subr.bf16.mxu0 0
    %2358 = vmatpush1.bf16.msra.mxu0 0
    %2359 = vmatprep.subr.bf16.mxu0 0
    %2360 = vmatpush1.bf16.msra.mxu0 0
    %2361 = vmatprep.subr.bf16.mxu0 0
    %2362 = vmatpush1.bf16.msra.mxu0 0
    %2363 = vmatprep.subr.bf16.mxu0 0
    %2364 = vmatpush1.bf16.msra.mxu0 0
    %2365 = vmatprep.mubr.bf16.mxu0 0
    %2366 = vmatmul.mubr.bf16.gmra.mrb[0].mxu0 %v2331
    %v2367 = vpop.f32.mrb[0].mxu0
    %v2368 = vadd.f32 0.0, %v2367
    %v2369 = vpop.f32.mrb[0].mxu0
    %v2370 = vpop.f32.mrb[0].mxu0
    %v2371 = vpop.f32.mrb[0].mxu0
    %2372 = vdwg.mxu0
    %v2374 = vsel %vm757, %v2243, 0
    %2376 = vmatprep.subr.bf16.mxu0 0
    %2377 = vmatpush1.bf16.msra.mxu0 %v1321
    %2378 = vmatprep.subr.bf16.mxu0 0
    %2379 = vmatpush1.bf16.msra.mxu0 0
    %2380 = vmatprep.subr.bf16.mxu0 0
    %2381 = vmatpush1.bf16.msra.mxu0 0
    %2382 = vmatprep.subr.bf16.mxu0 0
    %2383 = vmatpush1.bf16.msra.mxu0 0
    %2384 = vmatprep.subr.bf16.mxu0 0
    %2385 = vmatpush1.bf16.msra.mxu0 0
    %2386 = vmatprep.subr.bf16.mxu0 0
    %2387 = vmatpush1.bf16.msra.mxu0 0
    %2388 = vmatprep.subr.bf16.mxu0 0
    %2389 = vmatpush1.bf16.msra.mxu0 0
    %2390 = vmatprep.subr.bf16.mxu0 0
    %2391 = vmatpush1.bf16.msra.mxu0 0
    %2392 = vmatprep.subr.bf16.mxu0 0
    %2393 = vmatpush1.bf16.msra.mxu0 0
    %2394 = vmatprep.subr.bf16.mxu0 0
    %2395 = vmatpush1.bf16.msra.mxu0 0
    %2396 = vmatprep.subr.bf16.mxu0 0
    %2397 = vmatpush1.bf16.msra.mxu0 0
    %2398 = vmatprep.subr.bf16.mxu0 0
    %2399 = vmatpush1.bf16.msra.mxu0 0
    %2400 = vmatprep.subr.bf16.mxu0 0
    %2401 = vmatpush1.bf16.msra.mxu0 0
    %2402 = vmatprep.subr.bf16.mxu0 0
    %2403 = vmatpush1.bf16.msra.mxu0 0
    %2404 = vmatprep.subr.bf16.mxu0 0
    %2405 = vmatpush1.bf16.msra.mxu0 0
    %2406 = vmatprep.subr.bf16.mxu0 0
    %2407 = vmatpush1.bf16.msra.mxu0 0
    %2408 = vmatprep.mubr.bf16.mxu0 0
    %2409 = vmatmul.mubr.bf16.gmra.mrb[0].mxu0 %v2374
    %v2410 = vpop.f32.mrb[0].mxu0
    %v2411 = vadd.f32 0.0, %v2410
    %v2412 = vpop.f32.mrb[0].mxu0
    %v2413 = vpop.f32.mrb[0].mxu0
    %v2414 = vpop.f32.mrb[0].mxu0
    %2415 = vdwg.mxu0
    %v2416 = vadd.f32 %v2282, %v2325
    %v2417 = vadd.f32 %v2416, %v2368
    %v2418 = vadd.f32 %v2417, %v2411
    %v2419 = vadd.f32 %v2418, %v1370
    %2420 = vst [vmem:[%s9 + $0x8] sm:$0xff] %v2419
    // Predicated region
    $region58: #{causal_self_attention.1} parent=1 // pred_check
      _
    $region59: #{causal_self_attention.1} parent=1 // pred_check_branch
      %2422 = sbr.rel (0) target = $region61
    $region60: #{causal_self_attention.1} parent=1 // pred_region
      _
    $region61: #{causal_self_attention.1} parent=1 // pred_fallthru
      _
    // Predicated region
    $region62: #{causal_self_attention.1} parent=1 // pred_check
      _
    $region63: #{causal_self_attention.1} parent=1 // pred_check_branch
      %2424 = sbr.rel (0) target = $region65
    $region64: #{causal_self_attention.1} parent=1 // pred_region
      _
    $region65: #{causal_self_attention.1} parent=1 // pred_fallthru
      _
    %2425 = vsyncpa [#allocation3], 1
    %2426 = vsyncpa [#allocation5], 1
    %2427 = vsyncpa [#allocation8], 1

</llo_original>
